<compile_context>
chip_gen: v7x
topology: tpu7x:2x2x1
jax: 0.10.0
libtpu: 0.0.40
codegen_flags: <defaults>
</compile_context>

<pallas_src>
import jax
import jax.numpy as jnp
import numpy as np
from jax.experimental import pallas as pl
from jax.experimental.pallas import tpu as pltpu

# ---- problem sizes (small, consistent with the module's shape contract) ----
N, C_IN, C_OUT = 2, 4, 8
T, V = 8, 16
KT, KS = 3, 3          # temporal kernel size (odd), spatial kernel size K
STRIDE = 1
EPS = 1e-5

NT = N * T             # 16 rows  (sublane dim of the slab)
VCI = V * C_IN         # 64  cols (input slab lanes)
VCO = V * C_OUT        # 128 cols (lane-dense output slab)
INV_CNT = 1.0 / (N * T * V)   # 1 / (#elements per channel) for BN statistics


def st_gcn_kernel(x_ref, wbig_ref, bg_ref, wt_ref, sm1_ref, sp1_ref, pbc_ref,
                  g1_ref, b1_ref, g2_ref, b2_ref, gr_ref, brb_ref, o_ref):
    x = x_ref[...]                      # (NT, V*Cin)  f32
    pbc = pbc_ref[...]                  # (VCO, VCO)  kron(ones(V,V), I_Cout)

    def bn(s, gamma, beta):
        # training-mode BatchNorm per channel over (N,T,V), done in the 128-lane slab:
        # per-(v,c) column sums -> @ pbc sums over the V groups and broadcasts the
        # per-channel value back to all 128 lanes; then one fused scale/shift FMA.
        rs = jnp.sum(s, axis=0, keepdims=True)              # (1, VCO)
        rs2 = jnp.sum(s * s, axis=0, keepdims=True)         # (1, VCO)
        m = jnp.dot(rs, pbc, preferred_element_type=jnp.float32) * INV_CNT
        m2 = jnp.dot(rs2, pbc, preferred_element_type=jnp.float32) * INV_CNT
        scale = jax.lax.rsqrt(m2 - m * m + EPS) * gamma
        shift = beta - m * scale
        return s * scale + shift

    # ---- fused gcn (1x1 conv + A aggregation) and residual 1x1 conv: ONE matmul ----
    y = jnp.dot(x, wbig_ref[...], preferred_element_type=jnp.float32)   # (NT, 2*VCO)
    g = y[:, :VCO] + bg_ref[...]        # gcn branch (bias folded through A)
    r = y[:, VCO:]                      # residual branch (br dropped: cancelled by BN)

    # ---- tcn: BN -> ReLU -> (KT x 1) temporal conv (stride 1, pad (KT-1)//2) -> BN ----
    z = jnp.maximum(bn(g, g1_ref[...], b1_ref[...]), 0.0)               # (NT, VCO)
    # temporal shifts via block-diagonal shift matrices (handle batch boundaries + zero pad)
    z_m1 = jnp.dot(sm1_ref[...], z, preferred_element_type=jnp.float32)  # z[n, t-1]
    z_p1 = jnp.dot(sp1_ref[...], z, preferred_element_type=jnp.float32)  # z[n, t+1]
    h = jnp.dot(z_m1, wt_ref[0], preferred_element_type=jnp.float32)
    h = h + jnp.dot(z, wt_ref[1], preferred_element_type=jnp.float32)
    h = h + jnp.dot(z_p1, wt_ref[2], preferred_element_type=jnp.float32)
    h = bn(h, g2_ref[...], b2_ref[...])                                  # bt dropped
    # TODO(synk): Dropout with p>0 (training mode) would need in-kernel PRNG; p=0 -> identity.

    # ---- residual BN, add, final ReLU ----
    r = bn(r, gr_ref[...], brb_ref[...])
    o_ref[...] = jnp.maximum(h + r, 0.0).astype(o_ref.dtype)             # lane-dense store


def _prep_weights(A, p):
    """Fold A / kron / tile all parameters into lane-dense slab operands (plain JAX)."""
    # gcn: W_comb[(v,ci),(w,co)] = sum_k wg[ci, k*Cout+co] * A[k,v,w]
    wg3 = p['wg'].reshape(C_IN, KS, C_OUT)
    w_comb = jnp.einsum('ikc,kvw->viwc', wg3, A).reshape(VCI, VCO)
    # residual 1x1 conv as block-diagonal kron(I_V, wr); concatenate with W_comb
    w_res = jnp.kron(jnp.eye(V, dtype=jnp.float32), p['wr'])             # (VCI, VCO)
    w_big = jnp.concatenate([w_comb, w_res], axis=1)                     # (VCI, 2*VCO)

    # gcn bias propagated through the aggregation: bias[(w,c)] = sum_k bg[k,c]*sum_v A[k,v,w]
    bg3 = p['bg'].reshape(KS, C_OUT)
    a_sum = jnp.sum(A, axis=1)                                           # (K, V) over v
    bg_slab = jnp.einsum('kc,kw->wc', bg3, a_sum).reshape(1, VCO)

    # temporal conv taps as kron(I_V, wt[dt]) -> (KT, 128, 128)
    wt_kron = jnp.stack(
        [jnp.kron(jnp.eye(V, dtype=jnp.float32), p['wt'][d]) for d in range(KT)], axis=0)

    # temporal shift matrices over the (n, t) row index (block-diag per batch, zero at edges)
    eye_n = jnp.eye(N, dtype=jnp.float32)
    s_m1 = jnp.kron(eye_n, jnp.eye(T, k=-1, dtype=jnp.float32))          # picks z[n, t-1]
    s_p1 = jnp.kron(eye_n, jnp.eye(T, k=1, dtype=jnp.float32))           # picks z[n, t+1]

    # per-channel sum/broadcast operator for BN stats in the slab layout
    p_bcast = jnp.kron(jnp.ones((V, V), jnp.float32), jnp.eye(C_OUT, dtype=jnp.float32))

    tile = lambda v: jnp.tile(v.reshape(1, C_OUT), (1, V))               # (1, VCO)
    # NOTE: bt / br biases are intentionally dropped — a per-channel constant added
    # right before a training-mode BatchNorm is exactly cancelled by its mean subtraction.
    return (w_big, bg_slab, wt_kron, s_m1, s_p1, p_bcast,
            tile(p['g1']), tile(p['b1']), tile(p['g2']), tile(p['b2']),
            tile(p['gr']), tile(p['brb']))


def st_gcn_forward(x_nchw, A, p):
    """x_nchw: (N, Cin, T, V), A: (K, V, V) -> ((N, Cout, T, V), A)."""
    # NCHW -> lane-dense slab (N*T, V*Cin); layout plumbing stays in the wrapper.
    x_slab = jnp.transpose(x_nchw, (0, 2, 3, 1)).reshape(NT, VCI)
    args = (x_slab,) + _prep_weights(A, p)
    vmem = pl.BlockSpec(memory_space=pltpu.MemorySpace.VMEM)
    y = pl.pallas_call(
        st_gcn_kernel,
        out_shape=jax.ShapeDtypeStruct((NT, VCO), jnp.float32),          # lane-dense output
        in_specs=[vmem] * len(args),
        out_specs=vmem,
    )(*args)
    out = jnp.transpose(y.reshape(N, T, V, C_OUT), (0, 3, 1, 2))          # back to NCHW
    return out, A


# ------------------------- pure-JAX reference (NCHW, mirrors PyTorch) -------------------------
def _bn_ref(x, gamma, beta):
    mean = x.mean(axis=(0, 2, 3), keepdims=True)
    var = ((x - mean) ** 2).mean(axis=(0, 2, 3), keepdims=True)
    return (x - mean) / jnp.sqrt(var + EPS) * gamma.reshape(1, -1, 1, 1) + beta.reshape(1, -1, 1, 1)


def ref_forward(x, A, p):
    # residual: Conv2d(Cin, Cout, 1) + BN
    r = jnp.einsum('io,nitv->notv', p['wr'], x) + p['br'][0].reshape(1, -1, 1, 1)
    r = _bn_ref(r, p['gr'][0], p['brb'][0])
    # gcn: Conv2d(Cin, K*Cout, 1), view (N,K,Cout,T,V), einsum with A
    y = jnp.einsum('io,nitv->notv', p['wg'], x) + p['bg'][0].reshape(1, -1, 1, 1)
    y5 = y.reshape(N, KS, C_OUT, T, V)
    g = jnp.einsum('nkctv,kvw->nctw', y5, A)
    # tcn: BN -> ReLU -> (KT,1) conv stride 1 pad ((KT-1)//2, 0) -> BN -> Dropout(0)
    z = jnp.maximum(_bn_ref(g, p['g1'][0], p['b1'][0]), 0.0)
    pad = (KT - 1) // 2
    zp = jnp.pad(z, ((0, 0), (0, 0), (pad, pad), (0, 0)))
    h = jnp.zeros((N, C_OUT, T, V), jnp.float32)
    for dt in range(KT):
        h = h + jnp.einsum('io,nitv->notv', p['wt'][dt], zp[:, :, dt:dt + T, :])
    h = h + p['bt'][0].reshape(1, -1, 1, 1)
    h = _bn_ref(h, p['g2'][0], p['b2'][0])
    return jnp.maximum(h + r, 0.0), A


if __name__ == "__main__":
    key = jax.random.PRNGKey(0)
    ks = jax.random.split(key, 8)

    # deterministic synthetic parameters (shapes follow the module's __init__)
    params = {
        'wg': 0.1 * jax.random.normal(ks[0], (C_IN, KS * C_OUT), jnp.float32),
        'bg': 0.1 * jax.random.normal(ks[1], (1, KS * C_OUT), jnp.float32),
        'wt': 0.1 * jax.random.normal(ks[2], (KT, C_OUT, C_OUT), jnp.float32),
        'bt': 0.1 * jax.random.normal(ks[3], (1, C_OUT), jnp.float32),
        'wr': 0.1 * jax.random.normal(ks[4], (C_IN, C_OUT), jnp.float32),
        'br': 0.1 * jax.random.normal(ks[5], (1, C_OUT), jnp.float32),
        # BatchNorm2d default init: gamma=1, beta=0
        'g1': jnp.ones((1, C_OUT), jnp.float32), 'b1': jnp.zeros((1, C_OUT), jnp.float32),
        'g2': jnp.ones((1, C_OUT), jnp.float32), 'b2': jnp.zeros((1, C_OUT), jnp.float32),
        'gr': jnp.ones((1, C_OUT), jnp.float32), 'brb': jnp.zeros((1, C_OUT), jnp.float32),
    }

    x = jax.random.normal(ks[6], (N, C_IN, T, V), jnp.float32)        # (N, Cin, T, V)
    A = jax.random.uniform(ks[7], (KS, V, V), jnp.float32)            # (K, V, V)

    out, A_out = st_gcn_forward(x, A, params)
    out = jax.block_until_ready(out)

    ref, _ = ref_forward(x, A, params)
    np.testing.assert_allclose(np.asarray(out), np.asarray(ref), rtol=1e-4, atol=1e-4)
    assert out.shape == (N, C_OUT, T, V) and A_out.shape == (KS, V, V)

    print("KERNEL_OK")
</pallas_src>

<mosaic_0001>
module attributes {stable_mosaic.version = 11 : i64} {
  func.func @st_gcn_kernel(%arg0: memref<16x64xf32, #tpu.memory_space<vmem>>, %arg1: memref<64x256xf32, #tpu.memory_space<vmem>>, %arg2: memref<1x128xf32, #tpu.memory_space<vmem>>, %arg3: memref<3x128x128xf32, #tpu.memory_space<vmem>>, %arg4: memref<16x16xf32, #tpu.memory_space<vmem>>, %arg5: memref<16x16xf32, #tpu.memory_space<vmem>>, %arg6: memref<128x128xf32, #tpu.memory_space<vmem>>, %arg7: memref<1x128xf32, #tpu.memory_space<vmem>>, %arg8: memref<1x128xf32, #tpu.memory_space<vmem>>, %arg9: memref<1x128xf32, #tpu.memory_space<vmem>>, %arg10: memref<1x128xf32, #tpu.memory_space<vmem>>, %arg11: memref<1x128xf32, #tpu.memory_space<vmem>>, %arg12: memref<1x128xf32, #tpu.memory_space<vmem>>, %arg13: memref<16x128xf32, #tpu.memory_space<vmem>>) attributes {dimension_semantics = [], scalar_prefetch = 0 : i64, scratch_operands = 0 : i64, tpu.core_type = #tpu.core_type<tc>} {
    %c0 = arith.constant 0 : index
    %c0_0 = arith.constant 0 : index
    %0 = vector.load %arg0[%c0, %c0_0] : memref<16x64xf32, #tpu.memory_space<vmem>>, vector<16x64xf32>
    %c0_1 = arith.constant 0 : index
    %c0_2 = arith.constant 0 : index
    %1 = vector.load %arg6[%c0_1, %c0_2] : memref<128x128xf32, #tpu.memory_space<vmem>>, vector<128x128xf32>
    %c0_3 = arith.constant 0 : index
    %c0_4 = arith.constant 0 : index
    %2 = vector.load %arg1[%c0_3, %c0_4] : memref<64x256xf32, #tpu.memory_space<vmem>>, vector<64x256xf32>
    %cst = arith.constant dense<0.000000e+00> : vector<16x256xf32>
    %3 = tpu.matmul %0, %2, %cst {dimension_numbers = #tpu.dot_dimension_numbers<[1], [0], [0], [1], [0, 0, 1, 1], [], []>} : vector<16x64xf32>, vector<64x256xf32>, vector<16x256xf32> -> vector<16x256xf32>
    %4 = vector.extract_strided_slice %3 {offsets = [0, 0], sizes = [16, 128], strides = [1, 1]} : vector<16x256xf32> to vector<16x128xf32>
    %c0_5 = arith.constant 0 : index
    %c0_6 = arith.constant 0 : index
    %5 = vector.load %arg2[%c0_5, %c0_6] : memref<1x128xf32, #tpu.memory_space<vmem>>, vector<1x128xf32>
    %6 = vector.broadcast %5 : vector<1x128xf32> to vector<16x128xf32>
    %7 = arith.addf %4, %6 : vector<16x128xf32>
    %8 = vector.extract_strided_slice %3 {offsets = [0, 128], sizes = [16, 128], strides = [1, 1]} : vector<16x256xf32> to vector<16x128xf32>
    %c0_7 = arith.constant 0 : index
    %c0_8 = arith.constant 0 : index
    %9 = vector.load %arg7[%c0_7, %c0_8] : memref<1x128xf32, #tpu.memory_space<vmem>>, vector<1x128xf32>
    %c0_9 = arith.constant 0 : index
    %c0_10 = arith.constant 0 : index
    %10 = vector.load %arg8[%c0_9, %c0_10] : memref<1x128xf32, #tpu.memory_space<vmem>>, vector<1x128xf32>
    %cst_11 = arith.constant dense<0.000000e+00> : vector<128xf32>
    %11 = vector.multi_reduction <add>, %7, %cst_11 [0] : vector<16x128xf32> to vector<128xf32>
    %12 = vector.shape_cast %11 : vector<128xf32> to vector<1x128xf32>
    %13 = arith.mulf %7, %7 : vector<16x128xf32>
    %cst_12 = arith.constant dense<0.000000e+00> : vector<128xf32>
    %14 = vector.multi_reduction <add>, %13, %cst_12 [0] : vector<16x128xf32> to vector<128xf32>
    %15 = vector.shape_cast %14 : vector<128xf32> to vector<1x128xf32>
    %cst_13 = arith.constant dense<0.000000e+00> : vector<1x128xf32>
    %16 = tpu.matmul %12, %1, %cst_13 {dimension_numbers = #tpu.dot_dimension_numbers<[1], [0], [0], [1], [0, 0, 1, 1], [], []>} : vector<1x128xf32>, vector<128x128xf32>, vector<1x128xf32> -> vector<1x128xf32>
    %cst_14 = arith.constant 3.906250e-03 : f32
    %17 = vector.broadcast %cst_14 : f32 to vector<1x128xf32>
    %18 = arith.mulf %16, %17 : vector<1x128xf32>
    %cst_15 = arith.constant dense<0.000000e+00> : vector<1x128xf32>
    %19 = tpu.matmul %15, %1, %cst_15 {dimension_numbers = #tpu.dot_dimension_numbers<[1], [0], [0], [1], [0, 0, 1, 1], [], []>} : vector<1x128xf32>, vector<128x128xf32>, vector<1x128xf32> -> vector<1x128xf32>
    %cst_16 = arith.constant 3.906250e-03 : f32
    %20 = vector.broadcast %cst_16 : f32 to vector<1x128xf32>
    %21 = arith.mulf %19, %20 : vector<1x128xf32>
    %22 = arith.mulf %18, %18 : vector<1x128xf32>
    %23 = arith.subf %21, %22 : vector<1x128xf32>
    %cst_17 = arith.constant 9.99999974E-6 : f32
    %24 = vector.broadcast %cst_17 : f32 to vector<1x128xf32>
    %25 = arith.addf %23, %24 : vector<1x128xf32>
    %26 = math.rsqrt %25 : vector<1x128xf32>
    %27 = arith.mulf %26, %9 : vector<1x128xf32>
    %28 = arith.mulf %18, %27 : vector<1x128xf32>
    %29 = arith.subf %10, %28 : vector<1x128xf32>
    %30 = vector.broadcast %27 : vector<1x128xf32> to vector<16x128xf32>
    %31 = arith.mulf %7, %30 : vector<16x128xf32>
    %32 = vector.broadcast %29 : vector<1x128xf32> to vector<16x128xf32>
    %33 = arith.addf %31, %32 : vector<16x128xf32>
    %cst_18 = arith.constant 0.000000e+00 : f32
    %34 = vector.broadcast %cst_18 : f32 to vector<16x128xf32>
    %35 = arith.maximumf %33, %34 : vector<16x128xf32>
    %c0_19 = arith.constant 0 : index
    %c0_20 = arith.constant 0 : index
    %36 = vector.load %arg4[%c0_19, %c0_20] : memref<16x16xf32, #tpu.memory_space<vmem>>, vector<16x16xf32>
    %cst_21 = arith.constant dense<0.000000e+00> : vector<16x128xf32>
    %37 = tpu.matmul %36, %35, %cst_21 {dimension_numbers = #tpu.dot_dimension_numbers<[1], [0], [0], [1], [0, 0, 1, 1], [], []>} : vector<16x16xf32>, vector<16x128xf32>, vector<16x128xf32> -> vector<16x128xf32>
    %c0_22 = arith.constant 0 : index
    %c0_23 = arith.constant 0 : index
    %38 = vector.load %arg5[%c0_22, %c0_23] : memref<16x16xf32, #tpu.memory_space<vmem>>, vector<16x16xf32>
    %cst_24 = arith.constant dense<0.000000e+00> : vector<16x128xf32>
    %39 = tpu.matmul %38, %35, %cst_24 {dimension_numbers = #tpu.dot_dimension_numbers<[1], [0], [0], [1], [0, 0, 1, 1], [], []>} : vector<16x16xf32>, vector<16x128xf32>, vector<16x128xf32> -> vector<16x128xf32>
    %c0_25 = arith.constant 0 : index
    %c0_26 = arith.constant 0 : index
    %c0_27 = arith.constant 0 : index
    %40 = vector.load %arg3[%c0_25, %c0_26, %c0_27] : memref<3x128x128xf32, #tpu.memory_space<vmem>>, vector<1x128x128xf32>
    %41 = vector.shape_cast %40 : vector<1x128x128xf32> to vector<128x128xf32>
    %cst_28 = arith.constant dense<0.000000e+00> : vector<16x128xf32>
    %42 = tpu.matmul %37, %41, %cst_28 {dimension_numbers = #tpu.dot_dimension_numbers<[1], [0], [0], [1], [0, 0, 1, 1], [], []>} : vector<16x128xf32>, vector<128x128xf32>, vector<16x128xf32> -> vector<16x128xf32>
    %c1 = arith.constant 1 : index
    %c0_29 = arith.constant 0 : index
    %c0_30 = arith.constant 0 : index
    %43 = vector.load %arg3[%c1, %c0_29, %c0_30] : memref<3x128x128xf32, #tpu.memory_space<vmem>>, vector<1x128x128xf32>
    %44 = vector.shape_cast %43 : vector<1x128x128xf32> to vector<128x128xf32>
    %cst_31 = arith.constant dense<0.000000e+00> : vector<16x128xf32>
    %45 = tpu.matmul %35, %44, %cst_31 {dimension_numbers = #tpu.dot_dimension_numbers<[1], [0], [0], [1], [0, 0, 1, 1], [], []>} : vector<16x128xf32>, vector<128x128xf32>, vector<16x128xf32> -> vector<16x128xf32>
    %46 = arith.addf %42, %45 : vector<16x128xf32>
    %c2 = arith.constant 2 : index
    %c0_32 = arith.constant 0 : index
    %c0_33 = arith.constant 0 : index
    %47 = vector.load %arg3[%c2, %c0_32, %c0_33] : memref<3x128x128xf32, #tpu.memory_space<vmem>>, vector<1x128x128xf32>
    %48 = vector.shape_cast %47 : vector<1x128x128xf32> to vector<128x128xf32>
    %cst_34 = arith.constant dense<0.000000e+00> : vector<16x128xf32>
    %49 = tpu.matmul %39, %48, %cst_34 {dimension_numbers = #tpu.dot_dimension_numbers<[1], [0], [0], [1], [0, 0, 1, 1], [], []>} : vector<16x128xf32>, vector<128x128xf32>, vector<16x128xf32> -> vector<16x128xf32>
    %50 = arith.addf %46, %49 : vector<16x128xf32>
    %c0_35 = arith.constant 0 : index
    %c0_36 = arith.constant 0 : index
    %51 = vector.load %arg9[%c0_35, %c0_36] : memref<1x128xf32, #tpu.memory_space<vmem>>, vector<1x128xf32>
    %c0_37 = arith.constant 0 : index
    %c0_38 = arith.constant 0 : index
    %52 = vector.load %arg10[%c0_37, %c0_38] : memref<1x128xf32, #tpu.memory_space<vmem>>, vector<1x128xf32>
    %cst_39 = arith.constant dense<0.000000e+00> : vector<128xf32>
    %53 = vector.multi_reduction <add>, %50, %cst_39 [0] : vector<16x128xf32> to vector<128xf32>
    %54 = vector.shape_cast %53 : vector<128xf32> to vector<1x128xf32>
    %55 = arith.mulf %50, %50 : vector<16x128xf32>
    %cst_40 = arith.constant dense<0.000000e+00> : vector<128xf32>
    %56 = vector.multi_reduction <add>, %55, %cst_40 [0] : vector<16x128xf32> to vector<128xf32>
    %57 = vector.shape_cast %56 : vector<128xf32> to vector<1x128xf32>
    %cst_41 = arith.constant dense<0.000000e+00> : vector<1x128xf32>
    %58 = tpu.matmul %54, %1, %cst_41 {dimension_numbers = #tpu.dot_dimension_numbers<[1], [0], [0], [1], [0, 0, 1, 1], [], []>} : vector<1x128xf32>, vector<128x128xf32>, vector<1x128xf32> -> vector<1x128xf32>
    %cst_42 = arith.constant 3.906250e-03 : f32
    %59 = vector.broadcast %cst_42 : f32 to vector<1x128xf32>
    %60 = arith.mulf %58, %59 : vector<1x128xf32>
    %cst_43 = arith.constant dense<0.000000e+00> : vector<1x128xf32>
    %61 = tpu.matmul %57, %1, %cst_43 {dimension_numbers = #tpu.dot_dimension_numbers<[1], [0], [0], [1], [0, 0, 1, 1], [], []>} : vector<1x128xf32>, vector<128x128xf32>, vector<1x128xf32> -> vector<1x128xf32>
    %cst_44 = arith.constant 3.906250e-03 : f32
    %62 = vector.broadcast %cst_44 : f32 to vector<1x128xf32>
    %63 = arith.mulf %61, %62 : vector<1x128xf32>
    %64 = arith.mulf %60, %60 : vector<1x128xf32>
    %65 = arith.subf %63, %64 : vector<1x128xf32>
    %cst_45 = arith.constant 9.99999974E-6 : f32
    %66 = vector.broadcast %cst_45 : f32 to vector<1x128xf32>
    %67 = arith.addf %65, %66 : vector<1x128xf32>
    %68 = math.rsqrt %67 : vector<1x128xf32>
    %69 = arith.mulf %68, %51 : vector<1x128xf32>
    %70 = arith.mulf %60, %69 : vector<1x128xf32>
    %71 = arith.subf %52, %70 : vector<1x128xf32>
    %72 = vector.broadcast %69 : vector<1x128xf32> to vector<16x128xf32>
    %73 = arith.mulf %50, %72 : vector<16x128xf32>
    %74 = vector.broadcast %71 : vector<1x128xf32> to vector<16x128xf32>
    %75 = arith.addf %73, %74 : vector<16x128xf32>
    %c0_46 = arith.constant 0 : index
    %c0_47 = arith.constant 0 : index
    %76 = vector.load %arg11[%c0_46, %c0_47] : memref<1x128xf32, #tpu.memory_space<vmem>>, vector<1x128xf32>
    %c0_48 = arith.constant 0 : index
    %c0_49 = arith.constant 0 : index
    %77 = vector.load %arg12[%c0_48, %c0_49] : memref<1x128xf32, #tpu.memory_space<vmem>>, vector<1x128xf32>
    %cst_50 = arith.constant dense<0.000000e+00> : vector<128xf32>
    %78 = vector.multi_reduction <add>, %8, %cst_50 [0] : vector<16x128xf32> to vector<128xf32>
    %79 = vector.shape_cast %78 : vector<128xf32> to vector<1x128xf32>
    %80 = arith.mulf %8, %8 : vector<16x128xf32>
    %cst_51 = arith.constant dense<0.000000e+00> : vector<128xf32>
    %81 = vector.multi_reduction <add>, %80, %cst_51 [0] : vector<16x128xf32> to vector<128xf32>
    %82 = vector.shape_cast %81 : vector<128xf32> to vector<1x128xf32>
    %cst_52 = arith.constant dense<0.000000e+00> : vector<1x128xf32>
    %83 = tpu.matmul %79, %1, %cst_52 {dimension_numbers = #tpu.dot_dimension_numbers<[1], [0], [0], [1], [0, 0, 1, 1], [], []>} : vector<1x128xf32>, vector<128x128xf32>, vector<1x128xf32> -> vector<1x128xf32>
    %cst_53 = arith.constant 3.906250e-03 : f32
    %84 = vector.broadcast %cst_53 : f32 to vector<1x128xf32>
    %85 = arith.mulf %83, %84 : vector<1x128xf32>
    %cst_54 = arith.constant dense<0.000000e+00> : vector<1x128xf32>
    %86 = tpu.matmul %82, %1, %cst_54 {dimension_numbers = #tpu.dot_dimension_numbers<[1], [0], [0], [1], [0, 0, 1, 1], [], []>} : vector<1x128xf32>, vector<128x128xf32>, vector<1x128xf32> -> vector<1x128xf32>
    %cst_55 = arith.constant 3.906250e-03 : f32
    %87 = vector.broadcast %cst_55 : f32 to vector<1x128xf32>
    %88 = arith.mulf %86, %87 : vector<1x128xf32>
    %89 = arith.mulf %85, %85 : vector<1x128xf32>
    %90 = arith.subf %88, %89 : vector<1x128xf32>
    %cst_56 = arith.constant 9.99999974E-6 : f32
    %91 = vector.broadcast %cst_56 : f32 to vector<1x128xf32>
    %92 = arith.addf %90, %91 : vector<1x128xf32>
    %93 = math.rsqrt %92 : vector<1x128xf32>
    %94 = arith.mulf %93, %76 : vector<1x128xf32>
    %95 = arith.mulf %85, %94 : vector<1x128xf32>
    %96 = arith.subf %77, %95 : vector<1x128xf32>
    %97 = vector.broadcast %94 : vector<1x128xf32> to vector<16x128xf32>
    %98 = arith.mulf %8, %97 : vector<16x128xf32>
    %99 = vector.broadcast %96 : vector<1x128xf32> to vector<16x128xf32>
    %100 = arith.addf %98, %99 : vector<16x128xf32>
    %101 = arith.addf %75, %100 : vector<16x128xf32>
    %cst_57 = arith.constant 0.000000e+00 : f32
    %102 = vector.broadcast %cst_57 : f32 to vector<16x128xf32>
    %103 = arith.maximumf %101, %102 : vector<16x128xf32>
    %c0_58 = arith.constant 0 : index
    %c0_59 = arith.constant 0 : index
    %104 = vector.load %arg13[%c0_58, %c0_59] : memref<16x128xf32, #tpu.memory_space<vmem>>, vector<16x128xf32>
    tpu.vector_store %arg13[%c0_58, %c0_59], %103 {strides = array<i32>} : memref<16x128xf32, #tpu.memory_space<vmem>>, vector<16x128xf32>,
    return
  }
}

</mosaic_0001>

<llo_original>
// kernel: tpu_custom_call.1
$region0: #{tpu_custom_call.1}
  #allocation0 [shape = 'u32[]', space=smem, size = 0x4, offset = 0x4, fixed_abs, tag = 'smem constant byte address 0x4 - core index']
  #allocation1 [shape = 'u32[144,128]{1,0:T(1,128)}', space=vmem, size = 0x12000, scoped, tag = 'internal scratch']
  %s0 = inlined_call_operand.hbm [shape: f32[16,64], index: 0, kind: input, shape index: {}]
  %s1 = inlined_call_operand.hbm [shape: f32[64,256], index: 1, kind: input, shape index: {}]
  %s2 = inlined_call_operand.vmem [shape: f32[1,128], index: 2, kind: input, shape index: {}]
  %s3 = inlined_call_operand.hbm [shape: f32[3,128,128], index: 3, kind: input, shape index: {}]
  %s4 = inlined_call_operand.hbm [shape: f32[16,16], index: 4, kind: input, shape index: {}]
  %s5 = inlined_call_operand.vmem [shape: f32[16,16], index: 5, kind: input, shape index: {}]
  %s6 = inlined_call_operand.hbm [shape: f32[128,128], index: 6, kind: input, shape index: {}]
  %s7 = inlined_call_operand.vmem [shape: f32[1,128], index: 7, kind: input, shape index: {}]
  %s8 = inlined_call_operand.vmem [shape: f32[1,128], index: 8, kind: input, shape index: {}]
  %s9 = inlined_call_operand.vmem [shape: f32[1,128], index: 9, kind: input, shape index: {}]
  %s10 = inlined_call_operand.vmem [shape: f32[1,128], index: 10, kind: input, shape index: {}]
  %s11 = inlined_call_operand.vmem [shape: f32[1,128], index: 11, kind: input, shape index: {}]
  %s12 = inlined_call_operand.vmem [shape: f32[1,128], index: 12, kind: input, shape index: {}]
  %s13 = inlined_call_operand.hbm [shape: f32[16,128], index: 13, kind: output, shape index: {}]
  %s14 = sld [smem:[#allocation0]]
  $region82: #{tpu_custom_call.1} parent=0
    _
  %s16 = ssub.s32 1, %s14
  %s17 = scalar_select 0, %s16, %s14
  $region1: #{tpu_custom_call.1} parent=0
    #allocation2 [shape = 'u8[8192]{0}', space=vmem, size = 0x2000, scoped, tag = 'input window, operand 0, single buffered']
    #allocation3 [shape = 's32[1]{0}', space=sflag, size = 0x4, scoped, tag = 'scoped memory for tpu_custom_call.1']
    #allocation4 [shape = 's32[1]{0}', space=sflag, size = 0x4, scoped, tag = 'scoped memory for tpu_custom_call.1']
    #allocation5 [shape = 'u8[65536]{0}', space=vmem, size = 0x10000, scoped, tag = 'input window, operand 1, single buffered']
    #allocation6 [shape = 's32[1]{0}', space=sflag, size = 0x4, scoped, tag = 'scoped memory for tpu_custom_call.1']
    #allocation7 [shape = 'u8[196608]{0}', space=vmem, size = 0x30000, scoped, tag = 'input window, operand 3, single buffered']
    #allocation8 [shape = 'u8[8192]{0}', space=vmem, size = 0x2000, scoped, tag = 'input window, operand 4, single buffered']
    #allocation9 [shape = 's32[1]{0}', space=sflag, size = 0x4, scoped, tag = 'scoped memory for tpu_custom_call.1']
    #allocation10 [shape = 'u8[65536]{0}', space=vmem, size = 0x10000, scoped, tag = 'input window, operand 6, single buffered']
    #allocation11 [shape = 'u8[8192]{0}', space=vmem, size = 0x2000, scoped, tag = 'output window, operand 0, single buffered']
    %18 = vsyncpa [#allocation3], 0
    %19 = vsyncpa [#allocation6], 0
    %20 = vsyncpa [#allocation9], 0
    %21 = vsyncpa [#allocation4], 0
    // Predicated region
    $region2: #{tpu_custom_call.1} parent=1 // pred_check
      _
    $region3: #{tpu_custom_call.1} parent=1 // pred_check_branch
      %23 = sbr.rel (0) target = $region5
    $region4: #{tpu_custom_call.1} parent=1 // pred_region
      %s25 = ssub.s32 256, 256
      %26 = vsyncadd [#allocation3], %s25
      %s27 = sshll.u32 [#allocation2], 4
      %s28 = int_to_ptr.vmem [resolvable:$true] %s27
      %33 = dma.hbm_to_vmem [thread:$0]  %s0, 256, %s28, [#allocation3], 128, 128, 8
    $region5: #{tpu_custom_call.1} parent=1 // pred_fallthru
      _
    // Predicated region
    $region6: #{tpu_custom_call.1} parent=1 // pred_check
      _
    $region7: #{tpu_custom_call.1} parent=1 // pred_check_branch
      %35 = sbr.rel (0) target = $region9
    $region8: #{tpu_custom_call.1} parent=1 // pred_region
      %s37 = ssub.s32 2048, 2048
      %38 = vsyncadd [#allocation6], %s37
      %s39 = sshll.u32 [#allocation5], 4
      %s40 = int_to_ptr.vmem [resolvable:$true] %s39
      %45 = dma.hbm_to_vmem [thread:$0]  %s1, 2048, %s40, [#allocation6], 256, 256, 16
    $region9: #{tpu_custom_call.1} parent=1 // pred_fallthru
      _
    // Predicated region
    $region10: #{tpu_custom_call.1} parent=1 // pred_check
      _
    $region11: #{tpu_custom_call.1} parent=1 // pred_check_branch
      %47 = sbr.rel (0) target = $region13
    $region12: #{tpu_custom_call.1} parent=1 // pred_region
      _
    $region13: #{tpu_custom_call.1} parent=1 // pred_fallthru
      _
    // Predicated region
    $region14: #{tpu_custom_call.1} parent=1 // pred_check
      _
    $region15: #{tpu_custom_call.1} parent=1 // pred_check_branch
      %49 = sbr.rel (0) target = $region17
    $region16: #{tpu_custom_call.1} parent=1 // pred_region
      %s51 = ssub.s32 6144, 6144
      %52 = vsyncadd [#allocation6], %s51
      %s53 = sshll.u32 [#allocation7], 4
      %s54 = int_to_ptr.vmem [resolvable:$true] %s53
      %59 = dma.hbm_to_vmem [thread:$0]  %s3, 6144, %s54, [#allocation6], 128, 128, 8
    $region17: #{tpu_custom_call.1} parent=1 // pred_fallthru
      _
    // Predicated region
    $region18: #{tpu_custom_call.1} parent=1 // pred_check
      _
    $region19: #{tpu_custom_call.1} parent=1 // pred_check_branch
      %61 = sbr.rel (0) target = $region21
    $region20: #{tpu_custom_call.1} parent=1 // pred_region
      %s63 = ssub.s32 256, 256
      %64 = vsyncadd [#allocation9], %s63
      %s65 = sshll.u32 [#allocation8], 4
      %s66 = int_to_ptr.vmem [resolvable:$true] %s65
      %71 = dma.hbm_to_vmem [thread:$0]  %s4, 256, %s66, [#allocation9], 128, 128, 8
    $region21: #{tpu_custom_call.1} parent=1 // pred_fallthru
      _
    // Predicated region
    $region22: #{tpu_custom_call.1} parent=1 // pred_check
      _
    $region23: #{tpu_custom_call.1} parent=1 // pred_check_branch
      %73 = sbr.rel (0) target = $region25
    $region24: #{tpu_custom_call.1} parent=1 // pred_region
      _
    $region25: #{tpu_custom_call.1} parent=1 // pred_fallthru
      _
    // Predicated region
    $region26: #{tpu_custom_call.1} parent=1 // pred_check
      _
    $region27: #{tpu_custom_call.1} parent=1 // pred_check_branch
      %75 = sbr.rel (0) target = $region29
    $region28: #{tpu_custom_call.1} parent=1 // pred_region
      %s77 = ssub.s32 2048, 2048
      %78 = vsyncadd [#allocation9], %s77
      %s79 = sshll.u32 [#allocation10], 4
      %s80 = int_to_ptr.vmem [resolvable:$true] %s79
      %85 = dma.hbm_to_vmem [thread:$0]  %s6, 2048, %s80, [#allocation9], 128, 128, 8
    $region29: #{tpu_custom_call.1} parent=1 // pred_fallthru
      _
    // Predicated region
    $region30: #{tpu_custom_call.1} parent=1 // pred_check
      _
    $region31: #{tpu_custom_call.1} parent=1 // pred_check_branch
      %87 = sbr.rel (0) target = $region33
    $region32: #{tpu_custom_call.1} parent=1 // pred_region
      _
    $region33: #{tpu_custom_call.1} parent=1 // pred_fallthru
      _
    // Predicated region
    $region34: #{tpu_custom_call.1} parent=1 // pred_check
      _
    $region35: #{tpu_custom_call.1} parent=1 // pred_check_branch
      %89 = sbr.rel (0) target = $region37
    $region36: #{tpu_custom_call.1} parent=1 // pred_region
      _
    $region37: #{tpu_custom_call.1} parent=1 // pred_fallthru
      _
    // Predicated region
    $region38: #{tpu_custom_call.1} parent=1 // pred_check
      _
    $region39: #{tpu_custom_call.1} parent=1 // pred_check_branch
      %91 = sbr.rel (0) target = $region41
    $region40: #{tpu_custom_call.1} parent=1 // pred_region
      _
    $region41: #{tpu_custom_call.1} parent=1 // pred_fallthru
      _
    // Predicated region
    $region42: #{tpu_custom_call.1} parent=1 // pred_check
      _
    $region43: #{tpu_custom_call.1} parent=1 // pred_check_branch
      %93 = sbr.rel (0) target = $region45
    $region44: #{tpu_custom_call.1} parent=1 // pred_region
      _
    $region45: #{tpu_custom_call.1} parent=1 // pred_fallthru
      _
    // Predicated region
    $region46: #{tpu_custom_call.1} parent=1 // pred_check
      _
    $region47: #{tpu_custom_call.1} parent=1 // pred_check_branch
      %95 = sbr.rel (0) target = $region49
    $region48: #{tpu_custom_call.1} parent=1 // pred_region
      _
    $region49: #{tpu_custom_call.1} parent=1 // pred_fallthru
      _
    // Predicated region
    $region50: #{tpu_custom_call.1} parent=1 // pred_check
      _
    $region51: #{tpu_custom_call.1} parent=1 // pred_check_branch
      %97 = sbr.rel (0) target = $region53
    $region52: #{tpu_custom_call.1} parent=1 // pred_region
      _
    $region53: #{tpu_custom_call.1} parent=1 // pred_fallthru
      _
    // Predicated region
    $region54: #{tpu_custom_call.1} parent=1 // pred_check
      _
    $region55: #{tpu_custom_call.1} parent=1 // pred_check_branch
      %99 = sbr.rel (0) target = $region57
    $region56: #{tpu_custom_call.1} parent=1 // pred_region
      %100 = dma.done [#allocation3], 256
    $region57: #{tpu_custom_call.1} parent=1 // pred_fallthru
      _
    // Predicated region
    $region58: #{tpu_custom_call.1} parent=1 // pred_check
      _
    $region59: #{tpu_custom_call.1} parent=1 // pred_check_branch
      %102 = sbr.rel (0) target = $region61
    $region60: #{tpu_custom_call.1} parent=1 // pred_region
      %103 = dma.done [#allocation6], 2048
    $region61: #{tpu_custom_call.1} parent=1 // pred_fallthru
      _
    // Predicated region
    $region62: #{tpu_custom_call.1} parent=1 // pred_check
      _
    $region63: #{tpu_custom_call.1} parent=1 // pred_check_branch
      %105 = sbr.rel (0) target = $region65
    $region64: #{tpu_custom_call.1} parent=1 // pred_region
      %106 = dma.done [#allocation6], 6144
    $region65: #{tpu_custom_call.1} parent=1 // pred_fallthru
      _
    // Predicated region
    $region66: #{tpu_custom_call.1} parent=1 // pred_check
      _
    $region67: #{tpu_custom_call.1} parent=1 // pred_check_branch
      %108 = sbr.rel (0) target = $region69
    $region68: #{tpu_custom_call.1} parent=1 // pred_region
      %109 = dma.done [#allocation9], 256
    $region69: #{tpu_custom_call.1} parent=1 // pred_fallthru
      _
    // Predicated region
    $region70: #{tpu_custom_call.1} parent=1 // pred_check
      _
    $region71: #{tpu_custom_call.1} parent=1 // pred_check_branch
      %111 = sbr.rel (0) target = $region73
    $region72: #{tpu_custom_call.1} parent=1 // pred_region
      %112 = dma.done [#allocation9], 2048
    $region73: #{tpu_custom_call.1} parent=1 // pred_fallthru
      _
    %v113 = vld [vmem:[#allocation2] sm:$0xff]
    %v114 = vld [vmem:[#allocation2 + $0x8] sm:$0xff]
    %v115 = vld [vmem:[#allocation10] sm:$0xff]
    %v116 = vld [vmem:[#allocation10 + $0x8] sm:$0xff]
    %v117 = vld [vmem:[#allocation10 + $0x10] sm:$0xff]
    %v118 = vld [vmem:[#allocation10 + $0x18] sm:$0xff]
    %v119 = vld [vmem:[#allocation10 + $0x20] sm:$0xff]
    %v120 = vld [vmem:[#allocation10 + $0x28] sm:$0xff]
    %v121 = vld [vmem:[#allocation10 + $0x30] sm:$0xff]
    %v122 = vld [vmem:[#allocation10 + $0x38] sm:$0xff]
    %v123 = vld [vmem:[#allocation10 + $0x40] sm:$0xff]
    %v124 = vld [vmem:[#allocation10 + $0x48] sm:$0xff]
    %v125 = vld [vmem:[#allocation10 + $0x50] sm:$0xff]
    %v126 = vld [vmem:[#allocation10 + $0x58] sm:$0xff]
    %v127 = vld [vmem:[#allocation10 + $0x60] sm:$0xff]
    %v128 = vld [vmem:[#allocation10 + $0x68] sm:$0xff]
    %v129 = vld [vmem:[#allocation10 + $0x70] sm:$0xff]
    %v130 = vld [vmem:[#allocation10 + $0x78] sm:$0xff]
    %v131 = vld [vmem:[#allocation5] sm:$0xff]
    %v132 = vld [vmem:[#allocation5 + $0x8] sm:$0xff]
    %v133 = vld [vmem:[#allocation5 + $0x10] sm:$0xff]
    %v134 = vld [vmem:[#allocation5 + $0x18] sm:$0xff]
    %v135 = vld [vmem:[#allocation5 + $0x20] sm:$0xff]
    %v136 = vld [vmem:[#allocation5 + $0x28] sm:$0xff]
    %v137 = vld [vmem:[#allocation5 + $0x30] sm:$0xff]
    %v138 = vld [vmem:[#allocation5 + $0x38] sm:$0xff]
    %v139 = vld [vmem:[#allocation5 + $0x40] sm:$0xff]
    %v140 = vld [vmem:[#allocation5 + $0x48] sm:$0xff]
    %v141 = vld [vmem:[#allocation5 + $0x50] sm:$0xff]
    %v142 = vld [vmem:[#allocation5 + $0x58] sm:$0xff]
    %v143 = vld [vmem:[#allocation5 + $0x60] sm:$0xff]
    %v144 = vld [vmem:[#allocation5 + $0x68] sm:$0xff]
    %v145 = vld [vmem:[#allocation5 + $0x70] sm:$0xff]
    %v146 = vld [vmem:[#allocation5 + $0x78] sm:$0xff]
    %vm147 = vcmask 523264
    %v149 = vsel %vm147, %v113, 0
    %v152 = vsel %vm147, %v114, 0
    %154 = vmatprep.subr.mxu0 %v132
    %155 = vmatpush1.msra.mxu0 %v131
    %156 = vmatprep.subr.mxu0 %v134
    %157 = vmatpush1.msra.mxu0 %v133
    %158 = vmatprep.subr.mxu0 %v136
    %159 = vmatpush1.msra.mxu0 %v135
    %160 = vmatprep.subr.mxu0 %v138
    %161 = vmatpush1.msra.mxu0 %v137
    %162 = vmatprep.subr.mxu0 %v140
    %163 = vmatpush1.msra.mxu0 %v139
    %164 = vmatprep.subr.mxu0 %v142
    %165 = vmatpush1.msra.mxu0 %v141
    %166 = vmatprep.subr.mxu0 %v144
    %167 = vmatpush1.msra.mxu0 %v143
    %168 = vmatprep.subr.mxu0 %v146
    %169 = vmatpush1.msra.mxu0 %v145
    %170 = vmatprep.subr.mxu0 0.0
    %171 = vmatpush1.msra.mxu0 0.0
    %172 = vmatprep.subr.mxu0 0.0
    %173 = vmatpush1.msra.mxu0 0.0
    %174 = vmatprep.subr.mxu0 0.0
    %175 = vmatpush1.msra.mxu0 0.0
    %176 = vmatprep.subr.mxu0 0.0
    %177 = vmatpush1.msra.mxu0 0.0
    %178 = vmatprep.subr.mxu0 0.0
    %179 = vmatpush1.msra.mxu0 0.0
    %180 = vmatprep.subr.mxu0 0.0
    %181 = vmatpush1.msra.mxu0 0.0
    %182 = vmatprep.subr.mxu0 0.0
    %183 = vmatpush1.msra.mxu0 0.0
    %184 = vmatprep.subr.mxu0 0.0
    %185 = vmatpush1.msra.mxu0 0.0
    %186 = vmatprep.subr.mxu0 0.0
    %187 = vmatpush1.msra.mxu0 0.0
    %188 = vmatprep.subr.mxu0 0.0
    %189 = vmatpush1.msra.mxu0 0.0
    %190 = vmatprep.subr.mxu0 0.0
    %191 = vmatpush1.msra.mxu0 0.0
    %192 = vmatprep.subr.mxu0 0.0
    %193 = vmatpush1.msra.mxu0 0.0
    %194 = vmatprep.subr.mxu0 0.0
    %195 = vmatpush1.msra.mxu0 0.0
    %196 = vmatprep.subr.mxu0 0.0
    %197 = vmatpush1.msra.mxu0 0.0
    %198 = vmatprep.subr.mxu0 0.0
    %199 = vmatpush1.msra.mxu0 0.0
    %200 = vmatprep.subr.mxu0 0.0
    %201 = vmatpush1.msra.mxu0 0.0
    %202 = vmatprep.subr.mxu0 0.0
    %203 = vmatpush1.msra.mxu0 0.0
    %204 = vmatprep.subr.mxu0 0.0
    %205 = vmatpush1.msra.mxu0 0.0
    %206 = vmatprep.subr.mxu0 0.0
    %207 = vmatpush1.msra.mxu0 0.0
    %208 = vmatprep.subr.mxu0 0.0
    %209 = vmatpush1.msra.mxu0 0.0
    %210 = vmatprep.subr.mxu0 0.0
    %211 = vmatpush1.msra.mxu0 0.0
    %212 = vmatprep.subr.mxu0 0.0
    %213 = vmatpush1.msra.mxu0 0.0
    %214 = vmatprep.subr.mxu0 0.0
    %215 = vmatpush1.msra.mxu0 0.0
    %216 = vmatprep.subr.mxu0 0.0
    %217 = vmatpush1.msra.mxu0 0.0
    %218 = vmatprep.mubr.f32.mxu0 0.0
    %219 = vmatmul.mubr.f32.gmra.mrb[0].mxu0 %v149
    %v220 = vpop.f32.mrb[0].mxu0
    %v221 = vadd.f32 0.0, %v220
    %v222 = vpop.f32.mrb[0].mxu0
    %v223 = vadd.f32 0.0, %v222
    %224 = vmatprep.mubr.f32.mxu0 0.0
    %225 = vmatmul.mubr.f32.gmra.mrb[0].mxu0 %v152
    %v226 = vpop.f32.mrb[0].mxu0
    %v227 = vadd.f32 0.0, %v226
    %v228 = vpop.f32.mrb[0].mxu0
    %v229 = vadd.f32 0.0, %v228
    %230 = vdwg.mxu0
    %v231 = vld [vmem:[%s2] sm:$0x1]
    %v233 = vlaneseq
    %v234 = vshrl.u32 %v233, 7
    %v235 = vsub.s32 0, %v234
    %v236 = vrot.slane %v231, %v235
    %v238 = vadd.f32 %v221, %v236
    %v239 = vadd.f32 %v227, %v236
    %v240 = vld [vmem:[%s7] sm:$0x1]
    %v241 = vld [vmem:[%s8] sm:$0x1]
    %v242 = vadd.f32 %v238, %v239
    %v243 = vrot.slane %v242, 4
    %v244 = vadd.f32 %v242, %v243
    %v245 = vrot.slane %v244, 2
    %v246 = vadd.f32 %v244, %v245
    %v247 = vrot.slane %v246, 1
    %v248 = vadd.f32 %v246, %v247
    %v249 = vmul.f32 %v238, %v238
    %v250 = vmul.f32 %v239, %v239
    %v251 = vadd.f32 %v249, %v250
    %v252 = vrot.slane %v251, 4
    %v253 = vadd.f32 %v251, %v252
    %v254 = vrot.slane %v253, 2
    %v255 = vadd.f32 %v253, %v254
    %v256 = vrot.slane %v255, 1
    %v257 = vadd.f32 %v255, %v256
    %258 = vmatprep.subr.mxu0 0.0
    %259 = vmatpush1.msra.mxu0 %v115
    %260 = vmatprep.subr.mxu0 0.0
    %261 = vmatpush1.msra.mxu0 %v116
    %262 = vmatprep.subr.mxu0 0.0
    %263 = vmatpush1.msra.mxu0 %v117
    %264 = vmatprep.subr.mxu0 0.0
    %265 = vmatpush1.msra.mxu0 %v118
    %266 = vmatprep.subr.mxu0 0.0
    %267 = vmatpush1.msra.mxu0 %v119
    %268 = vmatprep.subr.mxu0 0.0
    %269 = vmatpush1.msra.mxu0 %v120
    %270 = vmatprep.subr.mxu0 0.0
    %271 = vmatpush1.msra.mxu0 %v121
    %272 = vmatprep.subr.mxu0 0.0
    %273 = vmatpush1.msra.mxu0 %v122
    %274 = vmatprep.subr.mxu0 0.0
    %275 = vmatpush1.msra.mxu0 %v123
    %276 = vmatprep.subr.mxu0 0.0
    %277 = vmatpush1.msra.mxu0 %v124
    %278 = vmatprep.subr.mxu0 0.0
    %279 = vmatpush1.msra.mxu0 %v125
    %280 = vmatprep.subr.mxu0 0.0
    %281 = vmatpush1.msra.mxu0 %v126
    %282 = vmatprep.subr.mxu0 0.0
    %283 = vmatpush1.msra.mxu0 %v127
    %284 = vmatprep.subr.mxu0 0.0
    %285 = vmatpush1.msra.mxu0 %v128
    %286 = vmatprep.subr.mxu0 0.0
    %287 = vmatpush1.msra.mxu0 %v129
    %288 = vmatprep.subr.mxu0 0.0
    %289 = vmatpush1.msra.mxu0 %v130
    %290 = vmatprep.subr.mxu0 0.0
    %291 = vmatpush1.msra.mxu0 0.0
    %292 = vmatprep.subr.mxu0 0.0
    %293 = vmatpush1.msra.mxu0 0.0
    %294 = vmatprep.subr.mxu0 0.0
    %295 = vmatpush1.msra.mxu0 0.0
    %296 = vmatprep.subr.mxu0 0.0
    %297 = vmatpush1.msra.mxu0 0.0
    %298 = vmatprep.subr.mxu0 0.0
    %299 = vmatpush1.msra.mxu0 0.0
    %300 = vmatprep.subr.mxu0 0.0
    %301 = vmatpush1.msra.mxu0 0.0
    %302 = vmatprep.subr.mxu0 0.0
    %303 = vmatpush1.msra.mxu0 0.0
    %304 = vmatprep.subr.mxu0 0.0
    %305 = vmatpush1.msra.mxu0 0.0
    %306 = vmatprep.subr.mxu0 0.0
    %307 = vmatpush1.msra.mxu0 0.0
    %308 = vmatprep.subr.mxu0 0.0
    %309 = vmatpush1.msra.mxu0 0.0
    %310 = vmatprep.subr.mxu0 0.0
    %311 = vmatpush1.msra.mxu0 0.0
    %312 = vmatprep.subr.mxu0 0.0
    %313 = vmatpush1.msra.mxu0 0.0
    %314 = vmatprep.subr.mxu0 0.0
    %315 = vmatpush1.msra.mxu0 0.0
    %316 = vmatprep.subr.mxu0 0.0
    %317 = vmatpush1.msra.mxu0 0.0
    %318 = vmatprep.subr.mxu0 0.0
    %319 = vmatpush1.msra.mxu0 0.0
    %320 = vmatprep.subr.mxu0 0.0
    %321 = vmatpush1.msra.mxu0 0.0
    %322 = vmatprep.mubr.f32.mxu0 0.0
    %323 = vmatmul.mubr.f32.gmra.mrb[0].mxu0 %v248
    %v324 = vpop.f32.mrb[0].mxu0
    %v325 = vadd.f32 0.0, %v324
    %v326 = vpop.f32.mrb[0].mxu0
    %327 = vdwg.mxu0
    %v328 = vmul.f32 %v325, 0.00390625
    %329 = vmatprep.subr.mxu0 0.0
    %330 = vmatpush1.msra.mxu0 %v115
    %331 = vmatprep.subr.mxu0 0.0
    %332 = vmatpush1.msra.mxu0 %v116
    %333 = vmatprep.subr.mxu0 0.0
    %334 = vmatpush1.msra.mxu0 %v117
    %335 = vmatprep.subr.mxu0 0.0
    %336 = vmatpush1.msra.mxu0 %v118
    %337 = vmatprep.subr.mxu0 0.0
    %338 = vmatpush1.msra.mxu0 %v119
    %339 = vmatprep.subr.mxu0 0.0
    %340 = vmatpush1.msra.mxu0 %v120
    %341 = vmatprep.subr.mxu0 0.0
    %342 = vmatpush1.msra.mxu0 %v121
    %343 = vmatprep.subr.mxu0 0.0
    %344 = vmatpush1.msra.mxu0 %v122
    %345 = vmatprep.subr.mxu0 0.0
    %346 = vmatpush1.msra.mxu0 %v123
    %347 = vmatprep.subr.mxu0 0.0
    %348 = vmatpush1.msra.mxu0 %v124
    %349 = vmatprep.subr.mxu0 0.0
    %350 = vmatpush1.msra.mxu0 %v125
    %351 = vmatprep.subr.mxu0 0.0
    %352 = vmatpush1.msra.mxu0 %v126
    %353 = vmatprep.subr.mxu0 0.0
    %354 = vmatpush1.msra.mxu0 %v127
    %355 = vmatprep.subr.mxu0 0.0
    %356 = vmatpush1.msra.mxu0 %v128
    %357 = vmatprep.subr.mxu0 0.0
    %358 = vmatpush1.msra.mxu0 %v129
    %359 = vmatprep.subr.mxu0 0.0
    %360 = vmatpush1.msra.mxu0 %v130
    %361 = vmatprep.subr.mxu0 0.0
    %362 = vmatpush1.msra.mxu0 0.0
    %363 = vmatprep.subr.mxu0 0.0
    %364 = vmatpush1.msra.mxu0 0.0
    %365 = vmatprep.subr.mxu0 0.0
    %366 = vmatpush1.msra.mxu0 0.0
    %367 = vmatprep.subr.mxu0 0.0
    %368 = vmatpush1.msra.mxu0 0.0
    %369 = vmatprep.subr.mxu0 0.0
    %370 = vmatpush1.msra.mxu0 0.0
    %371 = vmatprep.subr.mxu0 0.0
    %372 = vmatpush1.msra.mxu0 0.0
    %373 = vmatprep.subr.mxu0 0.0
    %374 = vmatpush1.msra.mxu0 0.0
    %375 = vmatprep.subr.mxu0 0.0
    %376 = vmatpush1.msra.mxu0 0.0
    %377 = vmatprep.subr.mxu0 0.0
    %378 = vmatpush1.msra.mxu0 0.0
    %379 = vmatprep.subr.mxu0 0.0
    %380 = vmatpush1.msra.mxu0 0.0
    %381 = vmatprep.subr.mxu0 0.0
    %382 = vmatpush1.msra.mxu0 0.0
    %383 = vmatprep.subr.mxu0 0.0
    %384 = vmatpush1.msra.mxu0 0.0
    %385 = vmatprep.subr.mxu0 0.0
    %386 = vmatpush1.msra.mxu0 0.0
    %387 = vmatprep.subr.mxu0 0.0
    %388 = vmatpush1.msra.mxu0 0.0
    %389 = vmatprep.subr.mxu0 0.0
    %390 = vmatpush1.msra.mxu0 0.0
    %391 = vmatprep.subr.mxu0 0.0
    %392 = vmatpush1.msra.mxu0 0.0
    %393 = vmatprep.mubr.f32.mxu0 0.0
    %394 = vmatmul.mubr.f32.gmra.mrb[0].mxu0 %v257
    %v395 = vpop.f32.mrb[0].mxu0
    %v396 = vadd.f32 0.0, %v395
    %v397 = vpop.f32.mrb[0].mxu0
    %398 = vdwg.mxu0
    %v399 = vmul.f32 %v396, 0.00390625
    %v400 = vmul.f32 %v328, %v328
    %v401 = vsub.f32 %v399, %v400
    %v402 = vadd.f32 %v401, 1e-05
    %v403 = vrsqrt.pop %v402
    %v404 = vmul.f32 %v403, %v240
    %v405 = vmul.f32 %v328, %v404
    %v406 = vsub.f32 %v241, %v405
    %v407 = vlaneseq
    %v408 = vshrl.u32 %v407, 7
    %v409 = vsub.s32 0, %v408
    %v410 = vrot.slane %v404, %v409
    %v411 = vmul.f32 %v238, %v410
    %v412 = vmul.f32 %v239, %v410
    %v414 = vlaneseq
    %v415 = vshrl.u32 %v414, 7
    %v416 = vsub.s32 0, %v415
    %v417 = vrot.slane %v406, %v416
    %v419 = vadd.f32 %v411, %v417
    %v420 = vadd.f32 %v412, %v417
    %v421 = vmax.f32 %v419, 0.0
    %v422 = vmax.f32 %v420, 0.0
    %v423 = vld [vmem:[#allocation8] sm:$0xff]
    %v424 = vld [vmem:[#allocation8 + $0x8] sm:$0xff]
    %vm425 = vcmask 130048
    %v427 = vsel %vm425, %v423, 0
    %v430 = vsel %vm425, %v424, 0
    %432 = vmatprep.subr.mxu0 0.0
    %433 = vmatpush1.msra.mxu0 %v421
    %434 = vmatprep.subr.mxu0 0.0
    %435 = vmatpush1.msra.mxu0 %v422
    %436 = vmatprep.subr.mxu0 0.0
    %437 = vmatpush1.msra.mxu0 0.0
    %438 = vmatprep.subr.mxu0 0.0
    %439 = vmatpush1.msra.mxu0 0.0
    %440 = vmatprep.subr.mxu0 0.0
    %441 = vmatpush1.msra.mxu0 0.0
    %442 = vmatprep.subr.mxu0 0.0
    %443 = vmatpush1.msra.mxu0 0.0
    %444 = vmatprep.subr.mxu0 0.0
    %445 = vmatpush1.msra.mxu0 0.0
    %446 = vmatprep.subr.mxu0 0.0
    %447 = vmatpush1.msra.mxu0 0.0
    %448 = vmatprep.subr.mxu0 0.0
    %449 = vmatpush1.msra.mxu0 0.0
    %450 = vmatprep.subr.mxu0 0.0
    %451 = vmatpush1.msra.mxu0 0.0
    %452 = vmatprep.subr.mxu0 0.0
    %453 = vmatpush1.msra.mxu0 0.0
    %454 = vmatprep.subr.mxu0 0.0
    %455 = vmatpush1.msra.mxu0 0.0
    %456 = vmatprep.subr.mxu0 0.0
    %457 = vmatpush1.msra.mxu0 0.0
    %458 = vmatprep.subr.mxu0 0.0
    %459 = vmatpush1.msra.mxu0 0.0
    %460 = vmatprep.subr.mxu0 0.0
    %461 = vmatpush1.msra.mxu0 0.0
    %462 = vmatprep.subr.mxu0 0.0
    %463 = vmatpush1.msra.mxu0 0.0
    %464 = vmatprep.subr.mxu0 0.0
    %465 = vmatpush1.msra.mxu0 0.0
    %466 = vmatprep.subr.mxu0 0.0
    %467 = vmatpush1.msra.mxu0 0.0
    %468 = vmatprep.subr.mxu0 0.0
    %469 = vmatpush1.msra.mxu0 0.0
    %470 = vmatprep.subr.mxu0 0.0
    %471 = vmatpush1.msra.mxu0 0.0
    %472 = vmatprep.subr.mxu0 0.0
    %473 = vmatpush1.msra.mxu0 0.0
    %474 = vmatprep.subr.mxu0 0.0
    %475 = vmatpush1.msra.mxu0 0.0
    %476 = vmatprep.subr.mxu0 0.0
    %477 = vmatpush1.msra.mxu0 0.0
    %478 = vmatprep.subr.mxu0 0.0
    %479 = vmatpush1.msra.mxu0 0.0
    %480 = vmatprep.subr.mxu0 0.0
    %481 = vmatpush1.msra.mxu0 0.0
    %482 = vmatprep.subr.mxu0 0.0
    %483 = vmatpush1.msra.mxu0 0.0
    %484 = vmatprep.subr.mxu0 0.0
    %485 = vmatpush1.msra.mxu0 0.0
    %486 = vmatprep.subr.mxu0 0.0
    %487 = vmatpush1.msra.mxu0 0.0
    %488 = vmatprep.subr.mxu0 0.0
    %489 = vmatpush1.msra.mxu0 0.0
    %490 = vmatprep.subr.mxu0 0.0
    %491 = vmatpush1.msra.mxu0 0.0
    %492 = vmatprep.subr.mxu0 0.0
    %493 = vmatpush1.msra.mxu0 0.0
    %494 = vmatprep.subr.mxu0 0.0
    %495 = vmatpush1.msra.mxu0 0.0
    %496 = vmatprep.mubr.f32.mxu0 0.0
    %497 = vmatmul.mubr.f32.gmra.mrb[0].mxu0 %v427
    %v498 = vpop.f32.mrb[0].mxu0
    %v499 = vadd.f32 0.0, %v498
    %v500 = vpop.f32.mrb[0].mxu0
    %501 = vmatprep.mubr.f32.mxu0 0.0
    %502 = vmatmul.mubr.f32.gmra.mrb[0].mxu0 %v430
    %v503 = vpop.f32.mrb[0].mxu0
    %v504 = vadd.f32 0.0, %v503
    %v505 = vpop.f32.mrb[0].mxu0
    %506 = vdwg.mxu0
    %v507 = vld [vmem:[%s5] sm:$0xff]
    %v508 = vld [vmem:[%s5 + $0x8] sm:$0xff]
    %v510 = vsel %vm425, %v507, 0
    %v513 = vsel %vm425, %v508, 0
    %515 = vmatprep.subr.mxu0 0.0
    %516 = vmatpush1.msra.mxu0 %v421
    %517 = vmatprep.subr.mxu0 0.0
    %518 = vmatpush1.msra.mxu0 %v422
    %519 = vmatprep.subr.mxu0 0.0
    %520 = vmatpush1.msra.mxu0 0.0
    %521 = vmatprep.subr.mxu0 0.0
    %522 = vmatpush1.msra.mxu0 0.0
    %523 = vmatprep.subr.mxu0 0.0
    %524 = vmatpush1.msra.mxu0 0.0
    %525 = vmatprep.subr.mxu0 0.0
    %526 = vmatpush1.msra.mxu0 0.0
    %527 = vmatprep.subr.mxu0 0.0
    %528 = vmatpush1.msra.mxu0 0.0
    %529 = vmatprep.subr.mxu0 0.0
    %530 = vmatpush1.msra.mxu0 0.0
    %531 = vmatprep.subr.mxu0 0.0
    %532 = vmatpush1.msra.mxu0 0.0
    %533 = vmatprep.subr.mxu0 0.0
    %534 = vmatpush1.msra.mxu0 0.0
    %535 = vmatprep.subr.mxu0 0.0
    %536 = vmatpush1.msra.mxu0 0.0
    %537 = vmatprep.subr.mxu0 0.0
    %538 = vmatpush1.msra.mxu0 0.0
    %539 = vmatprep.subr.mxu0 0.0
    %540 = vmatpush1.msra.mxu0 0.0
    %541 = vmatprep.subr.mxu0 0.0
    %542 = vmatpush1.msra.mxu0 0.0
    %543 = vmatprep.subr.mxu0 0.0
    %544 = vmatpush1.msra.mxu0 0.0
    %545 = vmatprep.subr.mxu0 0.0
    %546 = vmatpush1.msra.mxu0 0.0
    %547 = vmatprep.subr.mxu0 0.0
    %548 = vmatpush1.msra.mxu0 0.0
    %549 = vmatprep.subr.mxu0 0.0
    %550 = vmatpush1.msra.mxu0 0.0
    %551 = vmatprep.subr.mxu0 0.0
    %552 = vmatpush1.msra.mxu0 0.0
    %553 = vmatprep.subr.mxu0 0.0
    %554 = vmatpush1.msra.mxu0 0.0
    %555 = vmatprep.subr.mxu0 0.0
    %556 = vmatpush1.msra.mxu0 0.0
    %557 = vmatprep.subr.mxu0 0.0
    %558 = vmatpush1.msra.mxu0 0.0
    %559 = vmatprep.subr.mxu0 0.0
    %560 = vmatpush1.msra.mxu0 0.0
    %561 = vmatprep.subr.mxu0 0.0
    %562 = vmatpush1.msra.mxu0 0.0
    %563 = vmatprep.subr.mxu0 0.0
    %564 = vmatpush1.msra.mxu0 0.0
    %565 = vmatprep.subr.mxu0 0.0
    %566 = vmatpush1.msra.mxu0 0.0
    %567 = vmatprep.subr.mxu0 0.0
    %568 = vmatpush1.msra.mxu0 0.0
    %569 = vmatprep.subr.mxu0 0.0
    %570 = vmatpush1.msra.mxu0 0.0
    %571 = vmatprep.subr.mxu0 0.0
    %572 = vmatpush1.msra.mxu0 0.0
    %573 = vmatprep.subr.mxu0 0.0
    %574 = vmatpush1.msra.mxu0 0.0
    %575 = vmatprep.subr.mxu0 0.0
    %576 = vmatpush1.msra.mxu0 0.0
    %577 = vmatprep.subr.mxu0 0.0
    %578 = vmatpush1.msra.mxu0 0.0
    %579 = vmatprep.mubr.f32.mxu0 0.0
    %580 = vmatmul.mubr.f32.gmra.mrb[0].mxu0 %v510
    %v581 = vpop.f32.mrb[0].mxu0
    %v582 = vadd.f32 0.0, %v581
    %v583 = vpop.f32.mrb[0].mxu0
    %584 = vmatprep.mubr.f32.mxu0 0.0
    %585 = vmatmul.mubr.f32.gmra.mrb[0].mxu0 %v513
    %v586 = vpop.f32.mrb[0].mxu0
    %v587 = vadd.f32 0.0, %v586
    %v588 = vpop.f32.mrb[0].mxu0
    %589 = vdwg.mxu0
    %v590 = vld [vmem:[#allocation7] sm:$0xff]
    %v591 = vld [vmem:[#allocation7 + $0x8] sm:$0xff]
    %v592 = vld [vmem:[#allocation7 + $0x10] sm:$0xff]
    %v593 = vld [vmem:[#allocation7 + $0x18] sm:$0xff]
    %v594 = vld [vmem:[#allocation7 + $0x20] sm:$0xff]
    %v595 = vld [vmem:[#allocation7 + $0x28] sm:$0xff]
    %v596 = vld [vmem:[#allocation7 + $0x30] sm:$0xff]
    %v597 = vld [vmem:[#allocation7 + $0x38] sm:$0xff]
    %v598 = vld [vmem:[#allocation7 + $0x40] sm:$0xff]
    %v599 = vld [vmem:[#allocation7 + $0x48] sm:$0xff]
    %v600 = vld [vmem:[#allocation7 + $0x50] sm:$0xff]
    %v601 = vld [vmem:[#allocation7 + $0x58] sm:$0xff]
    %v602 = vld [vmem:[#allocation7 + $0x60] sm:$0xff]
    %v603 = vld [vmem:[#allocation7 + $0x68] sm:$0xff]
    %v604 = vld [vmem:[#allocation7 + $0x70] sm:$0xff]
    %v605 = vld [vmem:[#allocation7 + $0x78] sm:$0xff]
    %s606 = scalar_lea.vmem [#allocation7], 128
    %v607 = vld [vmem:[%s606] sm:$0xff]
    %v608 = vld [vmem:[%s606 + $0x8] sm:$0xff]
    %v609 = vld [vmem:[%s606 + $0x10] sm:$0xff]
    %v610 = vld [vmem:[%s606 + $0x18] sm:$0xff]
    %v611 = vld [vmem:[%s606 + $0x20] sm:$0xff]
    %v612 = vld [vmem:[%s606 + $0x28] sm:$0xff]
    %v613 = vld [vmem:[%s606 + $0x30] sm:$0xff]
    %v614 = vld [vmem:[%s606 + $0x38] sm:$0xff]
    %v615 = vld [vmem:[%s606 + $0x40] sm:$0xff]
    %v616 = vld [vmem:[%s606 + $0x48] sm:$0xff]
    %v617 = vld [vmem:[%s606 + $0x50] sm:$0xff]
    %v618 = vld [vmem:[%s606 + $0x58] sm:$0xff]
    %v619 = vld [vmem:[%s606 + $0x60] sm:$0xff]
    %v620 = vld [vmem:[%s606 + $0x68] sm:$0xff]
    %v621 = vld [vmem:[%s606 + $0x70] sm:$0xff]
    %v622 = vld [vmem:[%s606 + $0x78] sm:$0xff]
    %623 = vmatprep.subr.mxu0 0.0
    %624 = vmatpush1.msra.mxu0 %v607
    %625 = vmatprep.subr.mxu0 0.0
    %626 = vmatpush1.msra.mxu0 %v608
    %627 = vmatprep.subr.mxu0 0.0
    %628 = vmatpush1.msra.mxu0 %v609
    %629 = vmatprep.subr.mxu0 0.0
    %630 = vmatpush1.msra.mxu0 %v610
    %631 = vmatprep.subr.mxu0 0.0
    %632 = vmatpush1.msra.mxu0 %v611
    %633 = vmatprep.subr.mxu0 0.0
    %634 = vmatpush1.msra.mxu0 %v612
    %635 = vmatprep.subr.mxu0 0.0
    %636 = vmatpush1.msra.mxu0 %v613
    %637 = vmatprep.subr.mxu0 0.0
    %638 = vmatpush1.msra.mxu0 %v614
    %639 = vmatprep.subr.mxu0 0.0
    %640 = vmatpush1.msra.mxu0 %v615
    %641 = vmatprep.subr.mxu0 0.0
    %642 = vmatpush1.msra.mxu0 %v616
    %643 = vmatprep.subr.mxu0 0.0
    %644 = vmatpush1.msra.mxu0 %v617
    %645 = vmatprep.subr.mxu0 0.0
    %646 = vmatpush1.msra.mxu0 %v618
    %647 = vmatprep.subr.mxu0 0.0
    %648 = vmatpush1.msra.mxu0 %v619
    %649 = vmatprep.subr.mxu0 0.0
    %650 = vmatpush1.msra.mxu0 %v620
    %651 = vmatprep.subr.mxu0 0.0
    %652 = vmatpush1.msra.mxu0 %v621
    %653 = vmatprep.subr.mxu0 0.0
    %654 = vmatpush1.msra.mxu0 %v622
    %655 = vmatprep.subr.mxu0 0.0
    %656 = vmatpush1.msra.mxu0 0.0
    %657 = vmatprep.subr.mxu0 0.0
    %658 = vmatpush1.msra.mxu0 0.0
    %659 = vmatprep.subr.mxu0 0.0
    %660 = vmatpush1.msra.mxu0 0.0
    %661 = vmatprep.subr.mxu0 0.0
    %662 = vmatpush1.msra.mxu0 0.0
    %663 = vmatprep.subr.mxu0 0.0
    %664 = vmatpush1.msra.mxu0 0.0
    %665 = vmatprep.subr.mxu0 0.0
    %666 = vmatpush1.msra.mxu0 0.0
    %667 = vmatprep.subr.mxu0 0.0
    %668 = vmatpush1.msra.mxu0 0.0
    %669 = vmatprep.subr.mxu0 0.0
    %670 = vmatpush1.msra.mxu0 0.0
    %671 = vmatprep.subr.mxu0 0.0
    %672 = vmatpush1.msra.mxu0 0.0
    %673 = vmatprep.subr.mxu0 0.0
    %674 = vmatpush1.msra.mxu0 0.0
    %675 = vmatprep.subr.mxu0 0.0
    %676 = vmatpush1.msra.mxu0 0.0
    %677 = vmatprep.subr.mxu0 0.0
    %678 = vmatpush1.msra.mxu0 0.0
    %679 = vmatprep.subr.mxu0 0.0
    %680 = vmatpush1.msra.mxu0 0.0
    %681 = vmatprep.subr.mxu0 0.0
    %682 = vmatpush1.msra.mxu0 0.0
    %683 = vmatprep.subr.mxu0 0.0
    %684 = vmatpush1.msra.mxu0 0.0
    %685 = vmatprep.subr.mxu0 0.0
    %686 = vmatpush1.msra.mxu0 0.0
    %687 = vmatprep.mubr.f32.mxu0 0.0
    %688 = vmatmul.mubr.f32.gmra.mrb[0].mxu0 %v421
    %v689 = vpop.f32.mrb[0].mxu0
    %v690 = vadd.f32 0.0, %v689
    %v691 = vpop.f32.mrb[0].mxu0
    %692 = vmatprep.mubr.f32.mxu0 0.0
    %693 = vmatmul.mubr.f32.gmra.mrb[0].mxu0 %v422
    %v694 = vpop.f32.mrb[0].mxu0
    %v695 = vadd.f32 0.0, %v694
    %v696 = vpop.f32.mrb[0].mxu0
    %697 = vdwg.mxu0
    %698 = vmatprep.subr.mxu0 0.0
    %699 = vmatpush1.msra.mxu0 %v590
    %700 = vmatprep.subr.mxu0 0.0
    %701 = vmatpush1.msra.mxu0 %v591
    %702 = vmatprep.subr.mxu0 0.0
    %703 = vmatpush1.msra.mxu0 %v592
    %704 = vmatprep.subr.mxu0 0.0
    %705 = vmatpush1.msra.mxu0 %v593
    %706 = vmatprep.subr.mxu0 0.0
    %707 = vmatpush1.msra.mxu0 %v594
    %708 = vmatprep.subr.mxu0 0.0
    %709 = vmatpush1.msra.mxu0 %v595
    %710 = vmatprep.subr.mxu0 0.0
    %711 = vmatpush1.msra.mxu0 %v596
    %712 = vmatprep.subr.mxu0 0.0
    %713 = vmatpush1.msra.mxu0 %v597
    %714 = vmatprep.subr.mxu0 0.0
    %715 = vmatpush1.msra.mxu0 %v598
    %716 = vmatprep.subr.mxu0 0.0
    %717 = vmatpush1.msra.mxu0 %v599
    %718 = vmatprep.subr.mxu0 0.0
    %719 = vmatpush1.msra.mxu0 %v600
    %720 = vmatprep.subr.mxu0 0.0
    %721 = vmatpush1.msra.mxu0 %v601
    %722 = vmatprep.subr.mxu0 0.0
    %723 = vmatpush1.msra.mxu0 %v602
    %724 = vmatprep.subr.mxu0 0.0
    %725 = vmatpush1.msra.mxu0 %v603
    %726 = vmatprep.subr.mxu0 0.0
    %727 = vmatpush1.msra.mxu0 %v604
    %728 = vmatprep.subr.mxu0 0.0
    %729 = vmatpush1.msra.mxu0 %v605
    %730 = vmatprep.subr.mxu0 0.0
    %731 = vmatpush1.msra.mxu0 0.0
    %732 = vmatprep.subr.mxu0 0.0
    %733 = vmatpush1.msra.mxu0 0.0
    %734 = vmatprep.subr.mxu0 0.0
    %735 = vmatpush1.msra.mxu0 0.0
    %736 = vmatprep.subr.mxu0 0.0
    %737 = vmatpush1.msra.mxu0 0.0
    %738 = vmatprep.subr.mxu0 0.0
    %739 = vmatpush1.msra.mxu0 0.0
    %740 = vmatprep.subr.mxu0 0.0
    %741 = vmatpush1.msra.mxu0 0.0
    %742 = vmatprep.subr.mxu0 0.0
    %743 = vmatpush1.msra.mxu0 0.0
    %744 = vmatprep.subr.mxu0 0.0
    %745 = vmatpush1.msra.mxu0 0.0
    %746 = vmatprep.subr.mxu0 0.0
    %747 = vmatpush1.msra.mxu0 0.0
    %748 = vmatprep.subr.mxu0 0.0
    %749 = vmatpush1.msra.mxu0 0.0
    %750 = vmatprep.subr.mxu0 0.0
    %751 = vmatpush1.msra.mxu0 0.0
    %752 = vmatprep.subr.mxu0 0.0
    %753 = vmatpush1.msra.mxu0 0.0
    %754 = vmatprep.subr.mxu0 0.0
    %755 = vmatpush1.msra.mxu0 0.0
    %756 = vmatprep.subr.mxu0 0.0
    %757 = vmatpush1.msra.mxu0 0.0
    %758 = vmatprep.subr.mxu0 0.0
    %759 = vmatpush1.msra.mxu0 0.0
    %760 = vmatprep.subr.mxu0 0.0
    %761 = vmatpush1.msra.mxu0 0.0
    %762 = vmatprep.mubr.f32.mxu0 0.0
    %763 = vmatmul.mubr.f32.gmra.mrb[0].mxu0 %v499
    %v764 = vpop.f32.mrb[0].mxu0
    %v765 = vadd.f32 %v690, %v764
    %v766 = vpop.f32.mrb[0].mxu0
    %767 = vmatprep.mubr.f32.mxu0 0.0
    %768 = vmatmul.mubr.f32.gmra.mrb[0].mxu0 %v504
    %v769 = vpop.f32.mrb[0].mxu0
    %v770 = vadd.f32 %v695, %v769
    %v771 = vpop.f32.mrb[0].mxu0
    %772 = vdwg.mxu0
    %s773 = scalar_lea.vmem [#allocation7], 256
    %v774 = vld [vmem:[%s773] sm:$0xff]
    %v775 = vld [vmem:[%s773 + $0x8] sm:$0xff]
    %v776 = vld [vmem:[%s773 + $0x10] sm:$0xff]
    %v777 = vld [vmem:[%s773 + $0x18] sm:$0xff]
    %v778 = vld [vmem:[%s773 + $0x20] sm:$0xff]
    %v779 = vld [vmem:[%s773 + $0x28] sm:$0xff]
    %v780 = vld [vmem:[%s773 + $0x30] sm:$0xff]
    %v781 = vld [vmem:[%s773 + $0x38] sm:$0xff]
    %v782 = vld [vmem:[%s773 + $0x40] sm:$0xff]
    %v783 = vld [vmem:[%s773 + $0x48] sm:$0xff]
    %v784 = vld [vmem:[%s773 + $0x50] sm:$0xff]
    %v785 = vld [vmem:[%s773 + $0x58] sm:$0xff]
    %v786 = vld [vmem:[%s773 + $0x60] sm:$0xff]
    %v787 = vld [vmem:[%s773 + $0x68] sm:$0xff]
    %v788 = vld [vmem:[%s773 + $0x70] sm:$0xff]
    %v789 = vld [vmem:[%s773 + $0x78] sm:$0xff]
    %790 = vmatprep.subr.mxu0 0.0
    %791 = vmatpush1.msra.mxu0 %v774
    %792 = vmatprep.subr.mxu0 0.0
    %793 = vmatpush1.msra.mxu0 %v775
    %794 = vmatprep.subr.mxu0 0.0
    %795 = vmatpush1.msra.mxu0 %v776
    %796 = vmatprep.subr.mxu0 0.0
    %797 = vmatpush1.msra.mxu0 %v777
    %798 = vmatprep.subr.mxu0 0.0
    %799 = vmatpush1.msra.mxu0 %v778
    %800 = vmatprep.subr.mxu0 0.0
    %801 = vmatpush1.msra.mxu0 %v779
    %802 = vmatprep.subr.mxu0 0.0
    %803 = vmatpush1.msra.mxu0 %v780
    %804 = vmatprep.subr.mxu0 0.0
    %805 = vmatpush1.msra.mxu0 %v781
    %806 = vmatprep.subr.mxu0 0.0
    %807 = vmatpush1.msra.mxu0 %v782
    %808 = vmatprep.subr.mxu0 0.0
    %809 = vmatpush1.msra.mxu0 %v783
    %810 = vmatprep.subr.mxu0 0.0
    %811 = vmatpush1.msra.mxu0 %v784
    %812 = vmatprep.subr.mxu0 0.0
    %813 = vmatpush1.msra.mxu0 %v785
    %814 = vmatprep.subr.mxu0 0.0
    %815 = vmatpush1.msra.mxu0 %v786
    %816 = vmatprep.subr.mxu0 0.0
    %817 = vmatpush1.msra.mxu0 %v787
    %818 = vmatprep.subr.mxu0 0.0
    %819 = vmatpush1.msra.mxu0 %v788
    %820 = vmatprep.subr.mxu0 0.0
    %821 = vmatpush1.msra.mxu0 %v789
    %822 = vmatprep.subr.mxu0 0.0
    %823 = vmatpush1.msra.mxu0 0.0
    %824 = vmatprep.subr.mxu0 0.0
    %825 = vmatpush1.msra.mxu0 0.0
    %826 = vmatprep.subr.mxu0 0.0
    %827 = vmatpush1.msra.mxu0 0.0
    %828 = vmatprep.subr.mxu0 0.0
    %829 = vmatpush1.msra.mxu0 0.0
    %830 = vmatprep.subr.mxu0 0.0
    %831 = vmatpush1.msra.mxu0 0.0
    %832 = vmatprep.subr.mxu0 0.0
    %833 = vmatpush1.msra.mxu0 0.0
    %834 = vmatprep.subr.mxu0 0.0
    %835 = vmatpush1.msra.mxu0 0.0
    %836 = vmatprep.subr.mxu0 0.0
    %837 = vmatpush1.msra.mxu0 0.0
    %838 = vmatprep.subr.mxu0 0.0
    %839 = vmatpush1.msra.mxu0 0.0
    %840 = vmatprep.subr.mxu0 0.0
    %841 = vmatpush1.msra.mxu0 0.0
    %842 = vmatprep.subr.mxu0 0.0
    %843 = vmatpush1.msra.mxu0 0.0
    %844 = vmatprep.subr.mxu0 0.0
    %845 = vmatpush1.msra.mxu0 0.0
    %846 = vmatprep.subr.mxu0 0.0
    %847 = vmatpush1.msra.mxu0 0.0
    %848 = vmatprep.subr.mxu0 0.0
    %849 = vmatpush1.msra.mxu0 0.0
    %850 = vmatprep.subr.mxu0 0.0
    %851 = vmatpush1.msra.mxu0 0.0
    %852 = vmatprep.subr.mxu0 0.0
    %853 = vmatpush1.msra.mxu0 0.0
    %854 = vmatprep.mubr.f32.mxu0 0.0
    %855 = vmatmul.mubr.f32.gmra.mrb[0].mxu0 %v582
    %v856 = vpop.f32.mrb[0].mxu0
    %v857 = vadd.f32 0.0, %v856
    %v858 = vpop.f32.mrb[0].mxu0
    %859 = vmatprep.mubr.f32.mxu0 0.0
    %860 = vmatmul.mubr.f32.gmra.mrb[0].mxu0 %v587
    %v861 = vpop.f32.mrb[0].mxu0
    %v862 = vadd.f32 0.0, %v861
    %v863 = vpop.f32.mrb[0].mxu0
    %864 = vdwg.mxu0
    %v865 = vadd.f32 %v765, %v857
    %v866 = vadd.f32 %v770, %v862
    %v867 = vld [vmem:[%s9] sm:$0x1]
    %v868 = vld [vmem:[%s10] sm:$0x1]
    %v869 = vadd.f32 %v865, %v866
    %v870 = vrot.slane %v869, 4
    %v871 = vadd.f32 %v869, %v870
    %v872 = vrot.slane %v871, 2
    %v873 = vadd.f32 %v871, %v872
    %v874 = vrot.slane %v873, 1
    %v875 = vadd.f32 %v873, %v874
    %v876 = vmul.f32 %v865, %v865
    %v877 = vmul.f32 %v866, %v866
    %v878 = vadd.f32 %v876, %v877
    %v879 = vrot.slane %v878, 4
    %v880 = vadd.f32 %v878, %v879
    %v881 = vrot.slane %v880, 2
    %v882 = vadd.f32 %v880, %v881
    %v883 = vrot.slane %v882, 1
    %v884 = vadd.f32 %v882, %v883
    %885 = vmatprep.subr.mxu0 0.0
    %886 = vmatpush1.msra.mxu0 %v115
    %887 = vmatprep.subr.mxu0 0.0
    %888 = vmatpush1.msra.mxu0 %v116
    %889 = vmatprep.subr.mxu0 0.0
    %890 = vmatpush1.msra.mxu0 %v117
    %891 = vmatprep.subr.mxu0 0.0
    %892 = vmatpush1.msra.mxu0 %v118
    %893 = vmatprep.subr.mxu0 0.0
    %894 = vmatpush1.msra.mxu0 %v119
    %895 = vmatprep.subr.mxu0 0.0
    %896 = vmatpush1.msra.mxu0 %v120
    %897 = vmatprep.subr.mxu0 0.0
    %898 = vmatpush1.msra.mxu0 %v121
    %899 = vmatprep.subr.mxu0 0.0
    %900 = vmatpush1.msra.mxu0 %v122
    %901 = vmatprep.subr.mxu0 0.0
    %902 = vmatpush1.msra.mxu0 %v123
    %903 = vmatprep.subr.mxu0 0.0
    %904 = vmatpush1.msra.mxu0 %v124
    %905 = vmatprep.subr.mxu0 0.0
    %906 = vmatpush1.msra.mxu0 %v125
    %907 = vmatprep.subr.mxu0 0.0
    %908 = vmatpush1.msra.mxu0 %v126
    %909 = vmatprep.subr.mxu0 0.0
    %910 = vmatpush1.msra.mxu0 %v127
    %911 = vmatprep.subr.mxu0 0.0
    %912 = vmatpush1.msra.mxu0 %v128
    %913 = vmatprep.subr.mxu0 0.0
    %914 = vmatpush1.msra.mxu0 %v129
    %915 = vmatprep.subr.mxu0 0.0
    %916 = vmatpush1.msra.mxu0 %v130
    %917 = vmatprep.subr.mxu0 0.0
    %918 = vmatpush1.msra.mxu0 0.0
    %919 = vmatprep.subr.mxu0 0.0
    %920 = vmatpush1.msra.mxu0 0.0
    %921 = vmatprep.subr.mxu0 0.0
    %922 = vmatpush1.msra.mxu0 0.0
    %923 = vmatprep.subr.mxu0 0.0
    %924 = vmatpush1.msra.mxu0 0.0
    %925 = vmatprep.subr.mxu0 0.0
    %926 = vmatpush1.msra.mxu0 0.0
    %927 = vmatprep.subr.mxu0 0.0
    %928 = vmatpush1.msra.mxu0 0.0
    %929 = vmatprep.subr.mxu0 0.0
    %930 = vmatpush1.msra.mxu0 0.0
    %931 = vmatprep.subr.mxu0 0.0
    %932 = vmatpush1.msra.mxu0 0.0
    %933 = vmatprep.subr.mxu0 0.0
    %934 = vmatpush1.msra.mxu0 0.0
    %935 = vmatprep.subr.mxu0 0.0
    %936 = vmatpush1.msra.mxu0 0.0
    %937 = vmatprep.subr.mxu0 0.0
    %938 = vmatpush1.msra.mxu0 0.0
    %939 = vmatprep.subr.mxu0 0.0
    %940 = vmatpush1.msra.mxu0 0.0
    %941 = vmatprep.subr.mxu0 0.0
    %942 = vmatpush1.msra.mxu0 0.0
    %943 = vmatprep.subr.mxu0 0.0
    %944 = vmatpush1.msra.mxu0 0.0
    %945 = vmatprep.subr.mxu0 0.0
    %946 = vmatpush1.msra.mxu0 0.0
    %947 = vmatprep.subr.mxu0 0.0
    %948 = vmatpush1.msra.mxu0 0.0
    %949 = vmatprep.mubr.f32.mxu0 0.0
    %950 = vmatmul.mubr.f32.gmra.mrb[0].mxu0 %v875
    %v951 = vpop.f32.mrb[0].mxu0
    %v952 = vadd.f32 0.0, %v951
    %v953 = vpop.f32.mrb[0].mxu0
    %954 = vdwg.mxu0
    %v955 = vmul.f32 %v952, 0.00390625
    %956 = vmatprep.subr.mxu0 0.0
    %957 = vmatpush1.msra.mxu0 %v115
    %958 = vmatprep.subr.mxu0 0.0
    %959 = vmatpush1.msra.mxu0 %v116
    %960 = vmatprep.subr.mxu0 0.0
    %961 = vmatpush1.msra.mxu0 %v117
    %962 = vmatprep.subr.mxu0 0.0
    %963 = vmatpush1.msra.mxu0 %v118
    %964 = vmatprep.subr.mxu0 0.0
    %965 = vmatpush1.msra.mxu0 %v119
    %966 = vmatprep.subr.mxu0 0.0
    %967 = vmatpush1.msra.mxu0 %v120
    %968 = vmatprep.subr.mxu0 0.0
    %969 = vmatpush1.msra.mxu0 %v121
    %970 = vmatprep.subr.mxu0 0.0
    %971 = vmatpush1.msra.mxu0 %v122
    %972 = vmatprep.subr.mxu0 0.0
    %973 = vmatpush1.msra.mxu0 %v123
    %974 = vmatprep.subr.mxu0 0.0
    %975 = vmatpush1.msra.mxu0 %v124
    %976 = vmatprep.subr.mxu0 0.0
    %977 = vmatpush1.msra.mxu0 %v125
    %978 = vmatprep.subr.mxu0 0.0
    %979 = vmatpush1.msra.mxu0 %v126
    %980 = vmatprep.subr.mxu0 0.0
    %981 = vmatpush1.msra.mxu0 %v127
    %982 = vmatprep.subr.mxu0 0.0
    %983 = vmatpush1.msra.mxu0 %v128
    %984 = vmatprep.subr.mxu0 0.0
    %985 = vmatpush1.msra.mxu0 %v129
    %986 = vmatprep.subr.mxu0 0.0
    %987 = vmatpush1.msra.mxu0 %v130
    %988 = vmatprep.subr.mxu0 0.0
    %989 = vmatpush1.msra.mxu0 0.0
    %990 = vmatprep.subr.mxu0 0.0
    %991 = vmatpush1.msra.mxu0 0.0
    %992 = vmatprep.subr.mxu0 0.0
    %993 = vmatpush1.msra.mxu0 0.0
    %994 = vmatprep.subr.mxu0 0.0
    %995 = vmatpush1.msra.mxu0 0.0
    %996 = vmatprep.subr.mxu0 0.0
    %997 = vmatpush1.msra.mxu0 0.0
    %998 = vmatprep.subr.mxu0 0.0
    %999 = vmatpush1.msra.mxu0 0.0
    %1000 = vmatprep.subr.mxu0 0.0
    %1001 = vmatpush1.msra.mxu0 0.0
    %1002 = vmatprep.subr.mxu0 0.0
    %1003 = vmatpush1.msra.mxu0 0.0
    %1004 = vmatprep.subr.mxu0 0.0
    %1005 = vmatpush1.msra.mxu0 0.0
    %1006 = vmatprep.subr.mxu0 0.0
    %1007 = vmatpush1.msra.mxu0 0.0
    %1008 = vmatprep.subr.mxu0 0.0
    %1009 = vmatpush1.msra.mxu0 0.0
    %1010 = vmatprep.subr.mxu0 0.0
    %1011 = vmatpush1.msra.mxu0 0.0
    %1012 = vmatprep.subr.mxu0 0.0
    %1013 = vmatpush1.msra.mxu0 0.0
    %1014 = vmatprep.subr.mxu0 0.0
    %1015 = vmatpush1.msra.mxu0 0.0
    %1016 = vmatprep.subr.mxu0 0.0
    %1017 = vmatpush1.msra.mxu0 0.0
    %1018 = vmatprep.subr.mxu0 0.0
    %1019 = vmatpush1.msra.mxu0 0.0
    %1020 = vmatprep.mubr.f32.mxu0 0.0
    %1021 = vmatmul.mubr.f32.gmra.mrb[0].mxu0 %v884
    %v1022 = vpop.f32.mrb[0].mxu0
    %v1023 = vadd.f32 0.0, %v1022
    %v1024 = vpop.f32.mrb[0].mxu0
    %1025 = vdwg.mxu0
    %v1026 = vmul.f32 %v1023, 0.00390625
    %v1027 = vmul.f32 %v955, %v955
    %v1028 = vsub.f32 %v1026, %v1027
    %v1029 = vadd.f32 %v1028, 1e-05
    %v1030 = vrsqrt.pop %v1029
    %v1031 = vmul.f32 %v1030, %v867
    %v1032 = vmul.f32 %v955, %v1031
    %v1033 = vsub.f32 %v868, %v1032
    %v1034 = vlaneseq
    %v1035 = vshrl.u32 %v1034, 7
    %v1036 = vsub.s32 0, %v1035
    %v1037 = vrot.slane %v1031, %v1036
    %v1038 = vmul.f32 %v865, %v1037
    %v1039 = vmul.f32 %v866, %v1037
    %v1041 = vlaneseq
    %v1042 = vshrl.u32 %v1041, 7
    %v1043 = vsub.s32 0, %v1042
    %v1044 = vrot.slane %v1033, %v1043
    %v1046 = vadd.f32 %v1038, %v1044
    %v1047 = vadd.f32 %v1039, %v1044
    %v1048 = vld [vmem:[%s11] sm:$0x1]
    %v1049 = vld [vmem:[%s12] sm:$0x1]
    %v1050 = vadd.f32 %v223, %v229
    %v1051 = vrot.slane %v1050, 4
    %v1052 = vadd.f32 %v1050, %v1051
    %v1053 = vrot.slane %v1052, 2
    %v1054 = vadd.f32 %v1052, %v1053
    %v1055 = vrot.slane %v1054, 1
    %v1056 = vadd.f32 %v1054, %v1055
    %v1057 = vmul.f32 %v223, %v223
    %v1058 = vmul.f32 %v229, %v229
    %v1059 = vadd.f32 %v1057, %v1058
    %v1060 = vrot.slane %v1059, 4
    %v1061 = vadd.f32 %v1059, %v1060
    %v1062 = vrot.slane %v1061, 2
    %v1063 = vadd.f32 %v1061, %v1062
    %v1064 = vrot.slane %v1063, 1
    %v1065 = vadd.f32 %v1063, %v1064
    %1066 = vmatprep.subr.mxu0 0.0
    %1067 = vmatpush1.msra.mxu0 %v115
    %1068 = vmatprep.subr.mxu0 0.0
    %1069 = vmatpush1.msra.mxu0 %v116
    %1070 = vmatprep.subr.mxu0 0.0
    %1071 = vmatpush1.msra.mxu0 %v117
    %1072 = vmatprep.subr.mxu0 0.0
    %1073 = vmatpush1.msra.mxu0 %v118
    %1074 = vmatprep.subr.mxu0 0.0
    %1075 = vmatpush1.msra.mxu0 %v119
    %1076 = vmatprep.subr.mxu0 0.0
    %1077 = vmatpush1.msra.mxu0 %v120
    %1078 = vmatprep.subr.mxu0 0.0
    %1079 = vmatpush1.msra.mxu0 %v121
    %1080 = vmatprep.subr.mxu0 0.0
    %1081 = vmatpush1.msra.mxu0 %v122
    %1082 = vmatprep.subr.mxu0 0.0
    %1083 = vmatpush1.msra.mxu0 %v123
    %1084 = vmatprep.subr.mxu0 0.0
    %1085 = vmatpush1.msra.mxu0 %v124
    %1086 = vmatprep.subr.mxu0 0.0
    %1087 = vmatpush1.msra.mxu0 %v125
    %1088 = vmatprep.subr.mxu0 0.0
    %1089 = vmatpush1.msra.mxu0 %v126
    %1090 = vmatprep.subr.mxu0 0.0
    %1091 = vmatpush1.msra.mxu0 %v127
    %1092 = vmatprep.subr.mxu0 0.0
    %1093 = vmatpush1.msra.mxu0 %v128
    %1094 = vmatprep.subr.mxu0 0.0
    %1095 = vmatpush1.msra.mxu0 %v129
    %1096 = vmatprep.subr.mxu0 0.0
    %1097 = vmatpush1.msra.mxu0 %v130
    %1098 = vmatprep.subr.mxu0 0.0
    %1099 = vmatpush1.msra.mxu0 0.0
    %1100 = vmatprep.subr.mxu0 0.0
    %1101 = vmatpush1.msra.mxu0 0.0
    %1102 = vmatprep.subr.mxu0 0.0
    %1103 = vmatpush1.msra.mxu0 0.0
    %1104 = vmatprep.subr.mxu0 0.0
    %1105 = vmatpush1.msra.mxu0 0.0
    %1106 = vmatprep.subr.mxu0 0.0
    %1107 = vmatpush1.msra.mxu0 0.0
    %1108 = vmatprep.subr.mxu0 0.0
    %1109 = vmatpush1.msra.mxu0 0.0
    %1110 = vmatprep.subr.mxu0 0.0
    %1111 = vmatpush1.msra.mxu0 0.0
    %1112 = vmatprep.subr.mxu0 0.0
    %1113 = vmatpush1.msra.mxu0 0.0
    %1114 = vmatprep.subr.mxu0 0.0
    %1115 = vmatpush1.msra.mxu0 0.0
    %1116 = vmatprep.subr.mxu0 0.0
    %1117 = vmatpush1.msra.mxu0 0.0
    %1118 = vmatprep.subr.mxu0 0.0
    %1119 = vmatpush1.msra.mxu0 0.0
    %1120 = vmatprep.subr.mxu0 0.0
    %1121 = vmatpush1.msra.mxu0 0.0
    %1122 = vmatprep.subr.mxu0 0.0
    %1123 = vmatpush1.msra.mxu0 0.0
    %1124 = vmatprep.subr.mxu0 0.0
    %1125 = vmatpush1.msra.mxu0 0.0
    %1126 = vmatprep.subr.mxu0 0.0
    %1127 = vmatpush1.msra.mxu0 0.0
    %1128 = vmatprep.subr.mxu0 0.0
    %1129 = vmatpush1.msra.mxu0 0.0
    %1130 = vmatprep.mubr.f32.mxu0 0.0
    %1131 = vmatmul.mubr.f32.gmra.mrb[0].mxu0 %v1056
    %v1132 = vpop.f32.mrb[0].mxu0
    %v1133 = vadd.f32 0.0, %v1132
    %v1134 = vpop.f32.mrb[0].mxu0
    %1135 = vdwg.mxu0
    %v1136 = vmul.f32 %v1133, 0.00390625
    %1137 = vmatprep.subr.mxu0 0.0
    %1138 = vmatpush1.msra.mxu0 %v115
    %1139 = vmatprep.subr.mxu0 0.0
    %1140 = vmatpush1.msra.mxu0 %v116
    %1141 = vmatprep.subr.mxu0 0.0
    %1142 = vmatpush1.msra.mxu0 %v117
    %1143 = vmatprep.subr.mxu0 0.0
    %1144 = vmatpush1.msra.mxu0 %v118
    %1145 = vmatprep.subr.mxu0 0.0
    %1146 = vmatpush1.msra.mxu0 %v119
    %1147 = vmatprep.subr.mxu0 0.0
    %1148 = vmatpush1.msra.mxu0 %v120
    %1149 = vmatprep.subr.mxu0 0.0
    %1150 = vmatpush1.msra.mxu0 %v121
    %1151 = vmatprep.subr.mxu0 0.0
    %1152 = vmatpush1.msra.mxu0 %v122
    %1153 = vmatprep.subr.mxu0 0.0
    %1154 = vmatpush1.msra.mxu0 %v123
    %1155 = vmatprep.subr.mxu0 0.0
    %1156 = vmatpush1.msra.mxu0 %v124
    %1157 = vmatprep.subr.mxu0 0.0
    %1158 = vmatpush1.msra.mxu0 %v125
    %1159 = vmatprep.subr.mxu0 0.0
    %1160 = vmatpush1.msra.mxu0 %v126
    %1161 = vmatprep.subr.mxu0 0.0
    %1162 = vmatpush1.msra.mxu0 %v127
    %1163 = vmatprep.subr.mxu0 0.0
    %1164 = vmatpush1.msra.mxu0 %v128
    %1165 = vmatprep.subr.mxu0 0.0
    %1166 = vmatpush1.msra.mxu0 %v129
    %1167 = vmatprep.subr.mxu0 0.0
    %1168 = vmatpush1.msra.mxu0 %v130
    %1169 = vmatprep.subr.mxu0 0.0
    %1170 = vmatpush1.msra.mxu0 0.0
    %1171 = vmatprep.subr.mxu0 0.0
    %1172 = vmatpush1.msra.mxu0 0.0
    %1173 = vmatprep.subr.mxu0 0.0
    %1174 = vmatpush1.msra.mxu0 0.0
    %1175 = vmatprep.subr.mxu0 0.0
    %1176 = vmatpush1.msra.mxu0 0.0
    %1177 = vmatprep.subr.mxu0 0.0
    %1178 = vmatpush1.msra.mxu0 0.0
    %1179 = vmatprep.subr.mxu0 0.0
    %1180 = vmatpush1.msra.mxu0 0.0
    %1181 = vmatprep.subr.mxu0 0.0
    %1182 = vmatpush1.msra.mxu0 0.0
    %1183 = vmatprep.subr.mxu0 0.0
    %1184 = vmatpush1.msra.mxu0 0.0
    %1185 = vmatprep.subr.mxu0 0.0
    %1186 = vmatpush1.msra.mxu0 0.0
    %1187 = vmatprep.subr.mxu0 0.0
    %1188 = vmatpush1.msra.mxu0 0.0
    %1189 = vmatprep.subr.mxu0 0.0
    %1190 = vmatpush1.msra.mxu0 0.0
    %1191 = vmatprep.subr.mxu0 0.0
    %1192 = vmatpush1.msra.mxu0 0.0
    %1193 = vmatprep.subr.mxu0 0.0
    %1194 = vmatpush1.msra.mxu0 0.0
    %1195 = vmatprep.subr.mxu0 0.0
    %1196 = vmatpush1.msra.mxu0 0.0
    %1197 = vmatprep.subr.mxu0 0.0
    %1198 = vmatpush1.msra.mxu0 0.0
    %1199 = vmatprep.subr.mxu0 0.0
    %1200 = vmatpush1.msra.mxu0 0.0
    %1201 = vmatprep.mubr.f32.mxu0 0.0
    %1202 = vmatmul.mubr.f32.gmra.mrb[0].mxu0 %v1065
    %v1203 = vpop.f32.mrb[0].mxu0
    %v1204 = vadd.f32 0.0, %v1203
    %v1205 = vpop.f32.mrb[0].mxu0
    %1206 = vdwg.mxu0
    %v1207 = vmul.f32 %v1204, 0.00390625
    %v1208 = vmul.f32 %v1136, %v1136
    %v1209 = vsub.f32 %v1207, %v1208
    %v1210 = vadd.f32 %v1209, 1e-05
    %v1211 = vrsqrt.pop %v1210
    %v1212 = vmul.f32 %v1211, %v1048
    %v1213 = vmul.f32 %v1136, %v1212
    %v1214 = vsub.f32 %v1049, %v1213
    %v1215 = vlaneseq
    %v1216 = vshrl.u32 %v1215, 7
    %v1217 = vsub.s32 0, %v1216
    %v1218 = vrot.slane %v1212, %v1217
    %v1219 = vmul.f32 %v223, %v1218
    %v1220 = vmul.f32 %v229, %v1218
    %v1222 = vlaneseq
    %v1223 = vshrl.u32 %v1222, 7
    %v1224 = vsub.s32 0, %v1223
    %v1225 = vrot.slane %v1214, %v1224
    %v1227 = vadd.f32 %v1219, %v1225
    %v1228 = vadd.f32 %v1220, %v1225
    %v1229 = vadd.f32 %v1046, %v1227
    %v1230 = vadd.f32 %v1047, %v1228
    %v1231 = vmax.f32 %v1229, 0.0
    %v1232 = vmax.f32 %v1230, 0.0
    %1233 = vst [vmem:[#allocation11] sm:$0xff] %v1231
    %1234 = vst [vmem:[#allocation11 + $0x8] sm:$0xff] %v1232
    // Predicated region
    $region74: #{tpu_custom_call.1} parent=1 // pred_check
      _
    $region75: #{tpu_custom_call.1} parent=1 // pred_check_branch
      %1236 = sbr.rel (0) target = $region77
    $region76: #{tpu_custom_call.1} parent=1 // pred_region
      %s1238 = ssub.s32 256, 256
      %1239 = vsyncadd [#allocation4], %s1238
      %s1240 = sshll.u32 [#allocation11], 4
      %s1241 = int_to_ptr.vmem [resolvable:$true] %s1240
      %1246 = dma.vmem_to_hbm [thread:$0]  %s1241, 256, %s13, [#allocation4], 128, 128, 8
    $region77: #{tpu_custom_call.1} parent=1 // pred_fallthru
      _
    // Predicated region
    $region78: #{tpu_custom_call.1} parent=1 // pred_check
      _
    $region79: #{tpu_custom_call.1} parent=1 // pred_check_branch
      %1248 = sbr.rel (0) target = $region81
    $region80: #{tpu_custom_call.1} parent=1 // pred_region
      %1249 = dma.done [#allocation4], 256
    $region81: #{tpu_custom_call.1} parent=1 // pred_fallthru
      _
    %1250 = vsyncpa [#allocation3], 1
    %1251 = vsyncpa [#allocation6], 1
    %1252 = vsyncpa [#allocation9], 1
    %1253 = vsyncpa [#allocation4], 1

</llo_original>
